<compile_context>
chip_gen: v7x
topology: tpu7x:2x2x1
jax: 0.10.0
libtpu: 0.0.40
codegen_flags: <defaults>
</compile_context>

<pallas_src>
import jax
import jax.numpy as jnp
from jax import lax
from jax.experimental import pallas as pl
from jax.experimental.pallas import tpu as pltpu

EPS = 1e-5


def _band_weights(w_hwio, W):
    """Fold the W axis (kernel width 3, pad 1) of a conv kernel into a banded matmul.

    w_hwio: (3, 3, Ci, Co)  ->  (3*W*Ci, W*Co) with
      out[dy*W*Ci + w_in*Ci + ci, w_out*Co + c] = w_hwio[dy, w_in - w_out + 1, ci, c]
    when |w_in - w_out| <= 1, else 0.  Zero-padding along W is implicit in the band.
    """
    kh, kw, Ci, Co = w_hwio.shape
    w_in = jnp.arange(W)[:, None]
    w_out = jnp.arange(W)[None, :]
    dx = w_in - w_out + 1                                       # tap index, valid in [0, kw)
    valid = ((dx >= 0) & (dx < kw)).astype(w_hwio.dtype)        # (W, W)
    sel = w_hwio[:, jnp.clip(dx, 0, kw - 1), :, :]              # (kh, W_in, W_out, Ci, Co)
    sel = sel * valid[None, :, :, None, None]
    sel = jnp.transpose(sel, (0, 1, 3, 2, 4))                   # (dy, w_in, ci, w_out, c)
    return sel.reshape(kh * W * Ci, W * Co)


def fsnet_block(x_nchw, w1, g1, b1, w2, g2, b2, wres, *, matmul_dtype=jnp.bfloat16):
    """x_nchw: (N, Cin, H, W); conv weights in PyTorch OIHW convention."""
    N, Cin, H, W = x_nchw.shape
    Cout = w1.shape[0]
    NH, WC, WCin = N * H, W * Cout, W * Cin
    f32 = jnp.float32
    mmd = matmul_dtype
    inv_m = 1.0 / float(N * H * W)       # BN: elements per channel (training-mode stats)

    # ------------------- host-side layout prep (plain XLA, free) -------------------
    x_rows = jnp.transpose(x_nchw, (0, 2, 3, 1)).astype(f32).reshape(NH, WCin)

    w1_hwio = jnp.transpose(w1, (2, 3, 1, 0)).astype(f32)       # (3,3,Cin,Cout)
    w2_hwio = jnp.transpose(w2, (2, 3, 1, 0)).astype(f32)       # (3,3,Cout,Cout)
    wres_io = jnp.transpose(wres[:, :, 0, 0], (1, 0)).astype(f32)        # (Cin, Cout)

    b1_band = _band_weights(w1_hwio, W)                         # (3*WCin, WC)
    b2_band = _band_weights(w2_hwio, W)                         # (3*WC,   WC)
    bres_center = jnp.kron(jnp.eye(W, dtype=f32), wres_io)      # (WCin, WC) block-diag

    # conv1 centre tap packed with the (trimmed) residual band -> 256 output lanes.
    c1_center = jnp.concatenate([b1_band[WCin:2 * WCin], bres_center], axis=1).astype(mmd)
    # conv1 side taps (dy=0 rows 0:WCin, dy=2 rows WCin:).
    c1_sides = jnp.concatenate([b1_band[:WCin], b1_band[2 * WCin:]], axis=0).astype(mmd)
    b2_w = b2_band.astype(mmd)                                  # (3*WC, WC)

    def tile_c(v):                                              # per-channel vec -> (1, W*C)
        return jnp.tile(v.reshape(1, Cout).astype(f32), (1, W))
    bn_params = jnp.concatenate([tile_c(g1), tile_c(b1), tile_c(g2), tile_c(b2)], axis=0)

    # ------------------------------ fused kernel -----------------------------------
    def kernel(x_ref, c1c_ref, c1s_ref, b2_ref, bn_ref, out_ref):
        x_v = x_ref[...]                                        # (NH, WCin) f32
        bn = bn_ref[...]                                        # (4, WC)
        g1_t, be1_t, g2_t, be2_t = bn[0:1], bn[1:2], bn[2:3], bn[3:4]

        # channel-spread matrix + image-boundary row masks, generated on-core (no DMA)
        ch_i = lax.broadcasted_iota(jnp.int32, (WC, WC), 0) % Cout
        ch_j = lax.broadcasted_iota(jnp.int32, (WC, WC), 1) % Cout
        spread = (ch_i == ch_j).astype(jnp.float32)             # (WC, WC)
        h_idx = lax.broadcasted_iota(jnp.int32, (NH, 1), 0) % H
        m_prev = (h_idx > 0).astype(jnp.float32)                # row r-1 is inside the image
        m_next = (h_idx < H - 1).astype(jnp.float32)            # row r+1 is inside the image

        def mm(a, b):                                           # bf16 MXU, f32 accumulation
            return jnp.dot(a.astype(mmd), b, preferred_element_type=jnp.float32)

        def batchnorm(y, gamma_t, beta_t):
            # per-channel stats: cheap row-reduce (XLU) then a tiny spread matmul that
            # tiles the per-channel value back across the W*C lanes.
            mean = jnp.dot(jnp.sum(y, axis=0, keepdims=True), spread,
                           preferred_element_type=jnp.float32) * inv_m
            d = y - mean
            var = jnp.dot(jnp.sum(d * d, axis=0, keepdims=True), spread,
                          preferred_element_type=jnp.float32) * inv_m
            scale = gamma_t * lax.rsqrt(var + EPS)
            return d * scale + beta_t

        # conv1 (3x3, pad 1) + 1x1 residual conv.
        # dy taps = sublane rolls (XLU, masked at image boundaries); the centre tap's
        # RHS packs [conv1_centre | residual] into 256 output lanes so one MXU pass
        # yields both, sharing the LHS feed.
        x_up = pltpu.roll(x_v, shift=1, axis=0) * m_prev        # x[r-1]
        x_dn = pltpu.roll(x_v, shift=NH - 1, axis=0) * m_next   # x[r+1]
        c1s = c1s_ref[...]
        yc = mm(x_v, c1c_ref[...])                              # (NH, 2*WC)
        y1 = yc[:, :WC] + mm(x_up, c1s[:WCin]) + mm(x_dn, c1s[WCin:])
        resid = yc[:, WC:]

        # bn1 + relu (lane-dense, f32)
        y1 = jnp.maximum(batchnorm(y1, g1_t, be1_t), 0.0)

        # conv2 (3x3, pad 1): same roll-based taps, three accumulated matmuls (no
        # materialized (NH, 3*WC) patch buffer).
        b2v = b2_ref[...]
        y1_up = pltpu.roll(y1, shift=1, axis=0) * m_prev
        y1_dn = pltpu.roll(y1, shift=NH - 1, axis=0) * m_next
        y2 = (mm(y1_up, b2v[0:WC]) + mm(y1, b2v[WC:2 * WC]) + mm(y1_dn, b2v[2 * WC:]))

        # bn2 + residual add + relu
        y2 = batchnorm(y2, g2_t, be2_t)
        out_ref[...] = jnp.maximum(y2 + resid, 0.0)

    def full(shape):
        return pl.BlockSpec(shape, lambda i, _n=len(shape): (0,) * _n)

    # TODO(synk): for production FSNet sizes (large N*H*W, planes >= 64) retile into a
    # two-phase pipelined grid (phase 1: convs + partial per-channel sum/sum-sq into VMEM
    # scratch over 256-512 row blocks marked 'parallel'; phase 2: BN-apply + residual +
    # ReLU), and tile the banded conv2 weights over W (with halo) to fit v7x's 64 MiB VMEM.
    out_rows = pl.pallas_call(
        kernel,
        out_shape=jax.ShapeDtypeStruct((NH, WC), f32),          # lane-dense output (W*Cout lanes)
        grid=(1,),
        in_specs=[full(x_rows.shape), full(c1_center.shape), full(c1_sides.shape),
                  full(b2_w.shape), full(bn_params.shape)],
        out_specs=full((NH, WC)),
        compiler_params=pltpu.CompilerParams(
            dimension_semantics=("arbitrary",),
            vmem_limit_bytes=32 * 1024 * 1024),
    )(x_rows, c1_center, c1_sides, b2_w, bn_params)

    out = out_rows.reshape(N, H, W, Cout)
    return jnp.transpose(out, (0, 3, 1, 2))                     # back to NCHW


# -------------- pure-JAX reference (NCHW, lax.conv) for validation ------------------
def ref_block(x, w1, g1, b1, w2, g2, b2, wres):
    dn = ('NCHW', 'OIHW', 'NCHW')

    def bn(y, g, b):
        m = y.mean(axis=(0, 2, 3), keepdims=True)
        v = ((y - m) ** 2).mean(axis=(0, 2, 3), keepdims=True)
        return (y - m) / jnp.sqrt(v + EPS) * g.reshape(1, -1, 1, 1) + b.reshape(1, -1, 1, 1)

    r = lax.conv_general_dilated(x, wres, (1, 1), 'VALID', dimension_numbers=dn)
    y = lax.conv_general_dilated(x, w1, (1, 1), ((1, 1), (1, 1)), dimension_numbers=dn)
    y = jax.nn.relu(bn(y, g1, b1))
    y = lax.conv_general_dilated(y, w2, (1, 1), ((1, 1), (1, 1)), dimension_numbers=dn)
    y = bn(y, g2, b2)
    return jax.nn.relu(y + r)


if __name__ == "__main__":
    N, inplanes, planes, H, W = 2, 4, 8, 16, 16

    key = jax.random.PRNGKey(0)
    ks = jax.random.split(key, 8)
    x = jax.random.normal(ks[0], (N, inplanes, H, W), jnp.float32)
    w1 = 0.1 * jax.random.normal(ks[1], (planes, inplanes, 3, 3), jnp.float32)
    w2 = 0.1 * jax.random.normal(ks[2], (planes, planes, 3, 3), jnp.float32)
    wres = 0.1 * jax.random.normal(ks[3], (planes, inplanes, 1, 1), jnp.float32)
    g1 = jax.random.uniform(ks[4], (planes,), jnp.float32, 0.5, 1.5)
    b1 = 0.1 * jax.random.normal(ks[5], (planes,), jnp.float32)
    g2 = jax.random.uniform(ks[6], (planes,), jnp.float32, 0.5, 1.5)
    b2 = 0.1 * jax.random.normal(ks[7], (planes,), jnp.float32)

    ref = ref_block(x, w1, g1, b1, w2, g2, b2, wres)

    # Algorithmic-exactness check: f32 matmul path must match the reference tightly.
    out_f32 = jax.block_until_ready(
        jax.jit(lambda *a: fsnet_block(*a, matmul_dtype=jnp.float32))(
            x, w1, g1, b1, w2, g2, b2, wres))
    assert out_f32.shape == (N, planes, H, W)
    assert jnp.allclose(out_f32, ref, atol=3e-4, rtol=3e-4), \
        f"f32 path max abs err = {jnp.max(jnp.abs(out_f32 - ref))}"

    # Performance path (default): bf16 MXU operands, f32 accumulation & BN math.
    out_bf16 = jax.block_until_ready(
        jax.jit(fsnet_block)(x, w1, g1, b1, w2, g2, b2, wres))
    assert out_bf16.shape == (N, planes, H, W)
    assert jnp.allclose(out_bf16, ref, atol=6e-2, rtol=6e-2), \
        f"bf16 path max abs err = {jnp.max(jnp.abs(out_bf16 - ref))}"

    print("KERNEL_OK")
</pallas_src>

<mosaic_0001>
module attributes {stable_mosaic.version = 11 : i64} {
  func.func @kernel(%arg0: i32, %arg1: memref<32x64xf32, #tpu.memory_space<vmem>>, %arg2: memref<64x256xf32, #tpu.memory_space<vmem>>, %arg3: memref<128x128xf32, #tpu.memory_space<vmem>>, %arg4: memref<384x128xf32, #tpu.memory_space<vmem>>, %arg5: memref<4x128xf32, #tpu.memory_space<vmem>>, %arg6: memref<32x128xf32, #tpu.memory_space<vmem>>) attributes {dimension_semantics = [#tpu.dimension_semantics<arbitrary>], iteration_bounds = array<i64: 1>, scalar_prefetch = 0 : i64, scratch_operands = 0 : i64, tpu.core_type = #tpu.core_type<tc>, window_params = [{pipeline_mode = #tpu.pipeline_mode<synchronous>, transform_indices = @transform_0, window_bounds = array<i64: 32, 64>}, {pipeline_mode = #tpu.pipeline_mode<synchronous>, transform_indices = @transform_1, window_bounds = array<i64: 64, 256>}, {pipeline_mode = #tpu.pipeline_mode<synchronous>, transform_indices = @transform_2, window_bounds = array<i64: 128, 128>}, {pipeline_mode = #tpu.pipeline_mode<synchronous>, transform_indices = @transform_3, window_bounds = array<i64: 384, 128>}, {pipeline_mode = #tpu.pipeline_mode<synchronous>, transform_indices = @transform_4, window_bounds = array<i64: 4, 128>}, {pipeline_mode = #tpu.pipeline_mode<synchronous>, transform_indices = @transform_5, window_bounds = array<i64: 32, 128>}]} {
    %c0 = arith.constant 0 : index
    %c0_0 = arith.constant 0 : index
    %0 = vector.load %arg1[%c0, %c0_0] : memref<32x64xf32, #tpu.memory_space<vmem>>, vector<32x64xf32>
    %c0_1 = arith.constant 0 : index
    %c0_2 = arith.constant 0 : index
    %1 = vector.load %arg5[%c0_1, %c0_2] : memref<4x128xf32, #tpu.memory_space<vmem>>, vector<4x128xf32>
    %2 = vector.extract_strided_slice %1 {offsets = [0, 0], sizes = [1, 128], strides = [1, 1]} : vector<4x128xf32> to vector<1x128xf32>
    %3 = vector.extract_strided_slice %1 {offsets = [1, 0], sizes = [1, 128], strides = [1, 1]} : vector<4x128xf32> to vector<1x128xf32>
    %4 = vector.extract_strided_slice %1 {offsets = [2, 0], sizes = [1, 128], strides = [1, 1]} : vector<4x128xf32> to vector<1x128xf32>
    %5 = vector.extract_strided_slice %1 {offsets = [3, 0], sizes = [1, 128], strides = [1, 1]} : vector<4x128xf32> to vector<1x128xf32>
    %6 = tpu.iota {dimensions = array<i32: 0>} : vector<128x128xi32>
    %c8_i32 = arith.constant 8 : i32
    %c0_i32 = arith.constant 0 : i32
    %7 = arith.cmpi eq, %c8_i32, %c0_i32 : i32
    %c1_i32 = arith.constant 1 : i32
    %8 = arith.select %7, %c1_i32, %c8_i32 : i32
    %9 = vector.broadcast %8 : i32 to vector<128x128xi32>
    %10 = arith.remsi %6, %9 : vector<128x128xi32>
    %c0_i32_3 = arith.constant 0 : i32
    %11 = vector.broadcast %c0_i32_3 : i32 to vector<128x128xi32>
    %12 = arith.cmpi ne, %10, %11 : vector<128x128xi32>
    %c0_i32_4 = arith.constant 0 : i32
    %13 = vector.broadcast %c0_i32_4 : i32 to vector<128x128xi32>
    %14 = arith.cmpi slt, %10, %13 : vector<128x128xi32>
    %c0_i32_5 = arith.constant 0 : i32
    %15 = arith.cmpi slt, %8, %c0_i32_5 : i32
    %16 = vector.broadcast %15 : i1 to vector<128x128xi1>
    %17 = vector.broadcast %16 : vector<128x128xi1> to vector<128x128xi1>
    %18 = arith.xori %14, %17 : vector<128x128xi1>
    %19 = arith.andi %18, %12 : vector<128x128xi1>
    %20 = vector.broadcast %8 : i32 to vector<128x128xi32>
    %21 = arith.addi %10, %20 : vector<128x128xi32>
    %22 = arith.select %19, %21, %10 : vector<128x128xi1>, vector<128x128xi32>
    %23 = tpu.iota {dimensions = array<i32: 1>} : vector<128x128xi32>
    %c8_i32_6 = arith.constant 8 : i32
    %c0_i32_7 = arith.constant 0 : i32
    %24 = arith.cmpi eq, %c8_i32_6, %c0_i32_7 : i32
    %c1_i32_8 = arith.constant 1 : i32
    %25 = arith.select %24, %c1_i32_8, %c8_i32_6 : i32
    %26 = vector.broadcast %25 : i32 to vector<128x128xi32>
    %27 = arith.remsi %23, %26 : vector<128x128xi32>
    %c0_i32_9 = arith.constant 0 : i32
    %28 = vector.broadcast %c0_i32_9 : i32 to vector<128x128xi32>
    %29 = arith.cmpi ne, %27, %28 : vector<128x128xi32>
    %c0_i32_10 = arith.constant 0 : i32
    %30 = vector.broadcast %c0_i32_10 : i32 to vector<128x128xi32>
    %31 = arith.cmpi slt, %27, %30 : vector<128x128xi32>
    %c0_i32_11 = arith.constant 0 : i32
    %32 = arith.cmpi slt, %25, %c0_i32_11 : i32
    %33 = vector.broadcast %32 : i1 to vector<128x128xi1>
    %34 = vector.broadcast %33 : vector<128x128xi1> to vector<128x128xi1>
    %35 = arith.xori %31, %34 : vector<128x128xi1>
    %36 = arith.andi %35, %29 : vector<128x128xi1>
    %37 = vector.broadcast %25 : i32 to vector<128x128xi32>
    %38 = arith.addi %27, %37 : vector<128x128xi32>
    %39 = arith.select %36, %38, %27 : vector<128x128xi1>, vector<128x128xi32>
    %40 = arith.cmpi eq, %22, %39 : vector<128x128xi32>
    %41 = arith.extui %40 : vector<128x128xi1> to vector<128x128xi32>
    %42 = arith.sitofp %41 : vector<128x128xi32> to vector<128x128xf32>
    %43 = tpu.iota {dimensions = array<i32: 0>} : vector<32x1xi32>
    %c16_i32 = arith.constant 16 : i32
    %c0_i32_12 = arith.constant 0 : i32
    %44 = arith.cmpi eq, %c16_i32, %c0_i32_12 : i32
    %c1_i32_13 = arith.constant 1 : i32
    %45 = arith.select %44, %c1_i32_13, %c16_i32 : i32
    %46 = vector.broadcast %45 : i32 to vector<32x1xi32>
    %47 = arith.remsi %43, %46 : vector<32x1xi32>
    %c0_i32_14 = arith.constant 0 : i32
    %48 = vector.broadcast %c0_i32_14 : i32 to vector<32x1xi32>
    %49 = arith.cmpi ne, %47, %48 : vector<32x1xi32>
    %c0_i32_15 = arith.constant 0 : i32
    %50 = vector.broadcast %c0_i32_15 : i32 to vector<32x1xi32>
    %51 = arith.cmpi slt, %47, %50 : vector<32x1xi32>
    %c0_i32_16 = arith.constant 0 : i32
    %52 = arith.cmpi slt, %45, %c0_i32_16 : i32
    %53 = vector.broadcast %52 : i1 to vector<32x1xi1>
    %54 = vector.broadcast %53 : vector<32x1xi1> to vector<32x1xi1>
    %55 = arith.xori %51, %54 : vector<32x1xi1>
    %56 = arith.andi %55, %49 : vector<32x1xi1>
    %57 = vector.broadcast %45 : i32 to vector<32x1xi32>
    %58 = arith.addi %47, %57 : vector<32x1xi32>
    %59 = arith.select %56, %58, %47 : vector<32x1xi1>, vector<32x1xi32>
    %c0_i32_17 = arith.constant 0 : i32
    %60 = vector.broadcast %c0_i32_17 : i32 to vector<32x1xi32>
    %61 = arith.cmpi sgt, %59, %60 : vector<32x1xi32>
    %62 = arith.extui %61 : vector<32x1xi1> to vector<32x1xi32>
    %63 = arith.sitofp %62 : vector<32x1xi32> to vector<32x1xf32>
    %c15_i32 = arith.constant 15 : i32
    %64 = vector.broadcast %c15_i32 : i32 to vector<32x1xi32>
    %65 = arith.cmpi slt, %59, %64 : vector<32x1xi32>
    %66 = arith.extui %65 : vector<32x1xi1> to vector<32x1xi32>
    %67 = arith.sitofp %66 : vector<32x1xi32> to vector<32x1xf32>
    %c1_i32_18 = arith.constant 1 : i32
    %68 = tpu.dynamic_rotate %0 by %c1_i32_18 dim 0 : vector<32x64xf32>, i32 -> vector<32x64xf32>
    %69 = vector.broadcast %63 : vector<32x1xf32> to vector<32x64xf32>
    %70 = arith.mulf %68, %69 : vector<32x64xf32>
    %c31_i32 = arith.constant 31 : i32
    %71 = tpu.dynamic_rotate %0 by %c31_i32 dim 0 : vector<32x64xf32>, i32 -> vector<32x64xf32>
    %72 = vector.broadcast %67 : vector<32x1xf32> to vector<32x64xf32>
    %73 = arith.mulf %71, %72 : vector<32x64xf32>
    %c0_19 = arith.constant 0 : index
    %c0_20 = arith.constant 0 : index
    %74 = vector.load %arg3[%c0_19, %c0_20] : memref<128x128xf32, #tpu.memory_space<vmem>>, vector<128x128xf32>
    %c0_21 = arith.constant 0 : index
    %c0_22 = arith.constant 0 : index
    %75 = vector.load %arg2[%c0_21, %c0_22] : memref<64x256xf32, #tpu.memory_space<vmem>>, vector<64x256xf32>
    %cst = arith.constant dense<0.000000e+00> : vector<32x256xf32>
    %76 = tpu.matmul %0, %75, %cst {dimension_numbers = #tpu.dot_dimension_numbers<[1], [0], [0], [1], [0, 0, 1, 1], [], []>} : vector<32x64xf32>, vector<64x256xf32>, vector<32x256xf32> -> vector<32x256xf32>
    %77 = vector.extract_strided_slice %76 {offsets = [0, 0], sizes = [32, 128], strides = [1, 1]} : vector<32x256xf32> to vector<32x128xf32>
    %78 = vector.extract_strided_slice %74 {offsets = [0, 0], sizes = [64, 128], strides = [1, 1]} : vector<128x128xf32> to vector<64x128xf32>
    %cst_23 = arith.constant dense<0.000000e+00> : vector<32x128xf32>
    %79 = tpu.matmul %70, %78, %cst_23 {dimension_numbers = #tpu.dot_dimension_numbers<[1], [0], [0], [1], [0, 0, 1, 1], [], []>} : vector<32x64xf32>, vector<64x128xf32>, vector<32x128xf32> -> vector<32x128xf32>
    %80 = arith.addf %77, %79 : vector<32x128xf32>
    %81 = vector.extract_strided_slice %74 {offsets = [64, 0], sizes = [64, 128], strides = [1, 1]} : vector<128x128xf32> to vector<64x128xf32>
    %cst_24 = arith.constant dense<0.000000e+00> : vector<32x128xf32>
    %82 = tpu.matmul %73, %81, %cst_24 {dimension_numbers = #tpu.dot_dimension_numbers<[1], [0], [0], [1], [0, 0, 1, 1], [], []>} : vector<32x64xf32>, vector<64x128xf32>, vector<32x128xf32> -> vector<32x128xf32>
    %83 = arith.addf %80, %82 : vector<32x128xf32>
    %84 = vector.extract_strided_slice %76 {offsets = [0, 128], sizes = [32, 128], strides = [1, 1]} : vector<32x256xf32> to vector<32x128xf32>
    %cst_25 = arith.constant dense<0.000000e+00> : vector<128xf32>
    %85 = vector.multi_reduction <add>, %83, %cst_25 [0] : vector<32x128xf32> to vector<128xf32>
    %86 = vector.shape_cast %85 : vector<128xf32> to vector<1x128xf32>
    %cst_26 = arith.constant dense<0.000000e+00> : vector<1x128xf32>
    %87 = tpu.matmul %86, %42, %cst_26 {dimension_numbers = #tpu.dot_dimension_numbers<[1], [0], [0], [1], [0, 0, 1, 1], [], []>} : vector<1x128xf32>, vector<128x128xf32>, vector<1x128xf32> -> vector<1x128xf32>
    %cst_27 = arith.constant 0.001953125 : f32
    %88 = vector.broadcast %cst_27 : f32 to vector<1x128xf32>
    %89 = arith.mulf %87, %88 : vector<1x128xf32>
    %90 = vector.broadcast %89 : vector<1x128xf32> to vector<32x128xf32>
    %91 = arith.subf %83, %90 : vector<32x128xf32>
    %92 = arith.mulf %91, %91 : vector<32x128xf32>
    %cst_28 = arith.constant dense<0.000000e+00> : vector<128xf32>
    %93 = vector.multi_reduction <add>, %92, %cst_28 [0] : vector<32x128xf32> to vector<128xf32>
    %94 = vector.shape_cast %93 : vector<128xf32> to vector<1x128xf32>
    %cst_29 = arith.constant dense<0.000000e+00> : vector<1x128xf32>
    %95 = tpu.matmul %94, %42, %cst_29 {dimension_numbers = #tpu.dot_dimension_numbers<[1], [0], [0], [1], [0, 0, 1, 1], [], []>} : vector<1x128xf32>, vector<128x128xf32>, vector<1x128xf32> -> vector<1x128xf32>
    %cst_30 = arith.constant 0.001953125 : f32
    %96 = vector.broadcast %cst_30 : f32 to vector<1x128xf32>
    %97 = arith.mulf %95, %96 : vector<1x128xf32>
    %cst_31 = arith.constant 9.99999974E-6 : f32
    %98 = vector.broadcast %cst_31 : f32 to vector<1x128xf32>
    %99 = arith.addf %97, %98 : vector<1x128xf32>
    %100 = math.rsqrt %99 : vector<1x128xf32>
    %101 = arith.mulf %2, %100 : vector<1x128xf32>
    %102 = vector.broadcast %101 : vector<1x128xf32> to vector<32x128xf32>
    %103 = arith.mulf %91, %102 : vector<32x128xf32>
    %104 = vector.broadcast %3 : vector<1x128xf32> to vector<32x128xf32>
    %105 = arith.addf %103, %104 : vector<32x128xf32>
    %cst_32 = arith.constant 0.000000e+00 : f32
    %106 = vector.broadcast %cst_32 : f32 to vector<32x128xf32>
    %107 = arith.maximumf %105, %106 : vector<32x128xf32>
    %c0_33 = arith.constant 0 : index
    %c0_34 = arith.constant 0 : index
    %108 = vector.load %arg4[%c0_33, %c0_34] : memref<384x128xf32, #tpu.memory_space<vmem>>, vector<384x128xf32>
    %c1_i32_35 = arith.constant 1 : i32
    %109 = tpu.dynamic_rotate %107 by %c1_i32_35 dim 0 : vector<32x128xf32>, i32 -> vector<32x128xf32>
    %110 = vector.broadcast %63 : vector<32x1xf32> to vector<32x128xf32>
    %111 = arith.mulf %109, %110 : vector<32x128xf32>
    %c31_i32_36 = arith.constant 31 : i32
    %112 = tpu.dynamic_rotate %107 by %c31_i32_36 dim 0 : vector<32x128xf32>, i32 -> vector<32x128xf32>
    %113 = vector.broadcast %67 : vector<32x1xf32> to vector<32x128xf32>
    %114 = arith.mulf %112, %113 : vector<32x128xf32>
    %115 = vector.extract_strided_slice %108 {offsets = [0, 0], sizes = [128, 128], strides = [1, 1]} : vector<384x128xf32> to vector<128x128xf32>
    %cst_37 = arith.constant dense<0.000000e+00> : vector<32x128xf32>
    %116 = tpu.matmul %111, %115, %cst_37 {dimension_numbers = #tpu.dot_dimension_numbers<[1], [0], [0], [1], [0, 0, 1, 1], [], []>} : vector<32x128xf32>, vector<128x128xf32>, vector<32x128xf32> -> vector<32x128xf32>
    %117 = vector.extract_strided_slice %108 {offsets = [128, 0], sizes = [128, 128], strides = [1, 1]} : vector<384x128xf32> to vector<128x128xf32>
    %cst_38 = arith.constant dense<0.000000e+00> : vector<32x128xf32>
    %118 = tpu.matmul %107, %117, %cst_38 {dimension_numbers = #tpu.dot_dimension_numbers<[1], [0], [0], [1], [0, 0, 1, 1], [], []>} : vector<32x128xf32>, vector<128x128xf32>, vector<32x128xf32> -> vector<32x128xf32>
    %119 = arith.addf %116, %118 : vector<32x128xf32>
    %120 = vector.extract_strided_slice %108 {offsets = [256, 0], sizes = [128, 128], strides = [1, 1]} : vector<384x128xf32> to vector<128x128xf32>
    %cst_39 = arith.constant dense<0.000000e+00> : vector<32x128xf32>
    %121 = tpu.matmul %114, %120, %cst_39 {dimension_numbers = #tpu.dot_dimension_numbers<[1], [0], [0], [1], [0, 0, 1, 1], [], []>} : vector<32x128xf32>, vector<128x128xf32>, vector<32x128xf32> -> vector<32x128xf32>
    %122 = arith.addf %119, %121 : vector<32x128xf32>
    %cst_40 = arith.constant dense<0.000000e+00> : vector<128xf32>
    %123 = vector.multi_reduction <add>, %122, %cst_40 [0] : vector<32x128xf32> to vector<128xf32>
    %124 = vector.shape_cast %123 : vector<128xf32> to vector<1x128xf32>
    %cst_41 = arith.constant dense<0.000000e+00> : vector<1x128xf32>
    %125 = tpu.matmul %124, %42, %cst_41 {dimension_numbers = #tpu.dot_dimension_numbers<[1], [0], [0], [1], [0, 0, 1, 1], [], []>} : vector<1x128xf32>, vector<128x128xf32>, vector<1x128xf32> -> vector<1x128xf32>
    %cst_42 = arith.constant 0.001953125 : f32
    %126 = vector.broadcast %cst_42 : f32 to vector<1x128xf32>
    %127 = arith.mulf %125, %126 : vector<1x128xf32>
    %128 = vector.broadcast %127 : vector<1x128xf32> to vector<32x128xf32>
    %129 = arith.subf %122, %128 : vector<32x128xf32>
    %130 = arith.mulf %129, %129 : vector<32x128xf32>
    %cst_43 = arith.constant dense<0.000000e+00> : vector<128xf32>
    %131 = vector.multi_reduction <add>, %130, %cst_43 [0] : vector<32x128xf32> to vector<128xf32>
    %132 = vector.shape_cast %131 : vector<128xf32> to vector<1x128xf32>
    %cst_44 = arith.constant dense<0.000000e+00> : vector<1x128xf32>
    %133 = tpu.matmul %132, %42, %cst_44 {dimension_numbers = #tpu.dot_dimension_numbers<[1], [0], [0], [1], [0, 0, 1, 1], [], []>} : vector<1x128xf32>, vector<128x128xf32>, vector<1x128xf32> -> vector<1x128xf32>
    %cst_45 = arith.constant 0.001953125 : f32
    %134 = vector.broadcast %cst_45 : f32 to vector<1x128xf32>
    %135 = arith.mulf %133, %134 : vector<1x128xf32>
    %cst_46 = arith.constant 9.99999974E-6 : f32
    %136 = vector.broadcast %cst_46 : f32 to vector<1x128xf32>
    %137 = arith.addf %135, %136 : vector<1x128xf32>
    %138 = math.rsqrt %137 : vector<1x128xf32>
    %139 = arith.mulf %4, %138 : vector<1x128xf32>
    %140 = vector.broadcast %139 : vector<1x128xf32> to vector<32x128xf32>
    %141 = arith.mulf %129, %140 : vector<32x128xf32>
    %142 = vector.broadcast %5 : vector<1x128xf32> to vector<32x128xf32>
    %143 = arith.addf %141, %142 : vector<32x128xf32>
    %144 = arith.addf %143, %84 : vector<32x128xf32>
    %cst_47 = arith.constant 0.000000e+00 : f32
    %145 = vector.broadcast %cst_47 : f32 to vector<32x128xf32>
    %146 = arith.maximumf %144, %145 : vector<32x128xf32>
    %c0_48 = arith.constant 0 : index
    %c0_49 = arith.constant 0 : index
    %147 = vector.load %arg6[%c0_48, %c0_49] : memref<32x128xf32, #tpu.memory_space<vmem>>, vector<32x128xf32>
    tpu.vector_store %arg6[%c0_48, %c0_49], %146 {strides = array<i32>} : memref<32x128xf32, #tpu.memory_space<vmem>>, vector<32x128xf32>,
    return
  }
  func.func @transform_0(%arg0: i32) -> (i32, i32) {
    %c0_i32 = arith.constant 0 : i32
    %c0_i32_0 = arith.constant 0 : i32
    %c0_i32_1 = arith.constant 0 : i32
    return %c0_i32, %c0_i32_0 : i32, i32
  }
  func.func @transform_1(%arg0: i32) -> (i32, i32) {
    %c0_i32 = arith.constant 0 : i32
    %c0_i32_0 = arith.constant 0 : i32
    %c0_i32_1 = arith.constant 0 : i32
    return %c0_i32, %c0_i32_0 : i32, i32
  }
  func.func @transform_2(%arg0: i32) -> (i32, i32) {
    %c0_i32 = arith.constant 0 : i32
    %c0_i32_0 = arith.constant 0 : i32
    %c0_i32_1 = arith.constant 0 : i32
    return %c0_i32, %c0_i32_0 : i32, i32
  }
  func.func @transform_3(%arg0: i32) -> (i32, i32) {
    %c0_i32 = arith.constant 0 : i32
    %c0_i32_0 = arith.constant 0 : i32
    %c0_i32_1 = arith.constant 0 : i32
    return %c0_i32, %c0_i32_0 : i32, i32
  }
  func.func @transform_4(%arg0: i32) -> (i32, i32) {
    %c0_i32 = arith.constant 0 : i32
    %c0_i32_0 = arith.constant 0 : i32
    %c0_i32_1 = arith.constant 0 : i32
    return %c0_i32, %c0_i32_0 : i32, i32
  }
  func.func @transform_5(%arg0: i32) -> (i32, i32) {
    %c0_i32 = arith.constant 0 : i32
    %c0_i32_0 = arith.constant 0 : i32
    %c0_i32_1 = arith.constant 0 : i32
    return %c0_i32, %c0_i32_0 : i32, i32
  }
}

</mosaic_0001>

<llo_original>
// kernel: _lambda_.1
$region0: #{_lambda_.1}
  #allocation0 [shape = 'u32[]', space=smem, size = 0x4, offset = 0x4, fixed_abs, tag = 'smem constant byte address 0x4 - core index']
  #allocation1 [shape = 'u32[144,128]{1,0:T(1,128)}', space=vmem, size = 0x12000, scoped, tag = 'internal scratch']
  %s0 = inlined_call_operand.vmem [shape: f32[32,64], index: 0, kind: input, shape index: {}]
  %s1 = inlined_call_operand.vmem [shape: f32[64,256], index: 1, kind: input, shape index: {}]
  %s2 = inlined_call_operand.vmem [shape: f32[128,128], index: 2, kind: input, shape index: {}]
  %s3 = inlined_call_operand.vmem [shape: f32[384,128], index: 3, kind: input, shape index: {}]
  %s4 = inlined_call_operand.vmem [shape: f32[4,128], index: 4, kind: input, shape index: {}]
  %s5 = inlined_call_operand.vmem [shape: f32[32,128], index: 5, kind: output, shape index: {}]
  %s6 = sld [smem:[#allocation0]]
  $region30: #{_lambda_.1} parent=0
    _
  %s8 = ssub.s32 1, %s6
  %s9 = scalar_select 0, %s8, %s6
  // Predicated region
  $region2: #{_lambda_.1} parent=0 // pred_check
    _
  $region3: #{_lambda_.1} parent=0 // pred_check_branch
    %11 = sbr.rel (0) target = $region5
  $region4: #{_lambda_.1} parent=0 // pred_region
    _
  $region5: #{_lambda_.1} parent=0 // pred_fallthru
    _
  // Predicated region
  $region6: #{_lambda_.1} parent=0 // pred_check
    _
  $region7: #{_lambda_.1} parent=0 // pred_check_branch
    %13 = sbr.rel (0) target = $region9
  $region8: #{_lambda_.1} parent=0 // pred_region
    _
  $region9: #{_lambda_.1} parent=0 // pred_fallthru
    _
  // Predicated region
  $region10: #{_lambda_.1} parent=0 // pred_check
    _
  $region11: #{_lambda_.1} parent=0 // pred_check_branch
    %15 = sbr.rel (0) target = $region13
  $region12: #{_lambda_.1} parent=0 // pred_region
    _
  $region13: #{_lambda_.1} parent=0 // pred_fallthru
    _
  // Predicated region
  $region14: #{_lambda_.1} parent=0 // pred_check
    _
  $region15: #{_lambda_.1} parent=0 // pred_check_branch
    %17 = sbr.rel (0) target = $region17
  $region16: #{_lambda_.1} parent=0 // pred_region
    _
  $region17: #{_lambda_.1} parent=0 // pred_fallthru
    _
  // Predicated region
  $region18: #{_lambda_.1} parent=0 // pred_check
    _
  $region19: #{_lambda_.1} parent=0 // pred_check_branch
    %19 = sbr.rel (0) target = $region21
  $region20: #{_lambda_.1} parent=0 // pred_region
    _
  $region21: #{_lambda_.1} parent=0 // pred_fallthru
    _
  %v20 = vld [vmem:[%s0] sm:$0xff]
  %v21 = vld [vmem:[%s0 + $0x8] sm:$0xff]
  %v22 = vld [vmem:[%s0 + $0x10] sm:$0xff]
  %v23 = vld [vmem:[%s0 + $0x18] sm:$0xff]
  %v24 = vld [vmem:[%s4] sm:$0xf]
  %v25 = vlaneseq
  %v26 = vshrl.u32 %v25, 7
  %v27 = vadd.s32 %v26, 8
  %v28 = vadd.s32 %v26, 16
  %v29 = vadd.s32 %v26, 24
  %v30 = vadd.s32 %v26, 32
  %v31 = vadd.s32 %v26, 40
  %v32 = vadd.s32 %v26, 48
  %v33 = vadd.s32 %v26, 56
  %v34 = vadd.s32 %v26, 64
  %v35 = vadd.s32 %v26, 72
  %v36 = vadd.s32 %v26, 80
  %v37 = vadd.s32 %v26, 88
  %v38 = vadd.s32 %v26, 96
  %v39 = vadd.s32 %v26, 104
  %v40 = vadd.s32 %v26, 112
  %v41 = vadd.s32 %v26, 120
  %vm42 = vcmp.lt.s32.totalorder %v26, 0
  %v43 = vsub.s32 0, %v26
  %v44 = vsel %vm42, %v43, %v26
  %v45 = vshrl.u32 %v44, 3
  %v46 = vand.u32 %v44, 7
  %v47 = vsub.s32 0, %v46
  %v48 = vsel %vm42, %v47, %v46
  %vm49 = vcmp.lt.s32.totalorder %v27, 0
  %v50 = vsub.s32 0, %v27
  %v51 = vsel %vm49, %v50, %v27
  %v52 = vshrl.u32 %v51, 3
  %v53 = vand.u32 %v51, 7
  %v54 = vsub.s32 0, %v53
  %v55 = vsel %vm49, %v54, %v53
  %vm56 = vcmp.lt.s32.totalorder %v28, 0
  %v57 = vsub.s32 0, %v28
  %v58 = vsel %vm56, %v57, %v28
  %v59 = vshrl.u32 %v58, 3
  %v60 = vand.u32 %v58, 7
  %v61 = vsub.s32 0, %v60
  %v62 = vsel %vm56, %v61, %v60
  %vm63 = vcmp.lt.s32.totalorder %v29, 0
  %v64 = vsub.s32 0, %v29
  %v65 = vsel %vm63, %v64, %v29
  %v66 = vshrl.u32 %v65, 3
  %v67 = vand.u32 %v65, 7
  %v68 = vsub.s32 0, %v67
  %v69 = vsel %vm63, %v68, %v67
  %vm70 = vcmp.lt.s32.totalorder %v30, 0
  %v71 = vsub.s32 0, %v30
  %v72 = vsel %vm70, %v71, %v30
  %v73 = vshrl.u32 %v72, 3
  %v74 = vand.u32 %v72, 7
  %v75 = vsub.s32 0, %v74
  %v76 = vsel %vm70, %v75, %v74
  %vm77 = vcmp.lt.s32.totalorder %v31, 0
  %v78 = vsub.s32 0, %v31
  %v79 = vsel %vm77, %v78, %v31
  %v80 = vshrl.u32 %v79, 3
  %v81 = vand.u32 %v79, 7
  %v82 = vsub.s32 0, %v81
  %v83 = vsel %vm77, %v82, %v81
  %vm84 = vcmp.lt.s32.totalorder %v32, 0
  %v85 = vsub.s32 0, %v32
  %v86 = vsel %vm84, %v85, %v32
  %v87 = vshrl.u32 %v86, 3
  %v88 = vand.u32 %v86, 7
  %v89 = vsub.s32 0, %v88
  %v90 = vsel %vm84, %v89, %v88
  %vm91 = vcmp.lt.s32.totalorder %v33, 0
  %v92 = vsub.s32 0, %v33
  %v93 = vsel %vm91, %v92, %v33
  %v94 = vshrl.u32 %v93, 3
  %v95 = vand.u32 %v93, 7
  %v96 = vsub.s32 0, %v95
  %v97 = vsel %vm91, %v96, %v95
  %vm98 = vcmp.lt.s32.totalorder %v34, 0
  %v99 = vsub.s32 0, %v34
  %v100 = vsel %vm98, %v99, %v34
  %v101 = vshrl.u32 %v100, 3
  %v102 = vand.u32 %v100, 7
  %v103 = vsub.s32 0, %v102
  %v104 = vsel %vm98, %v103, %v102
  %vm105 = vcmp.lt.s32.totalorder %v35, 0
  %v106 = vsub.s32 0, %v35
  %v107 = vsel %vm105, %v106, %v35
  %v108 = vshrl.u32 %v107, 3
  %v109 = vand.u32 %v107, 7
  %v110 = vsub.s32 0, %v109
  %v111 = vsel %vm105, %v110, %v109
  %vm112 = vcmp.lt.s32.totalorder %v36, 0
  %v113 = vsub.s32 0, %v36
  %v114 = vsel %vm112, %v113, %v36
  %v115 = vshrl.u32 %v114, 3
  %v116 = vand.u32 %v114, 7
  %v117 = vsub.s32 0, %v116
  %v118 = vsel %vm112, %v117, %v116
  %vm119 = vcmp.lt.s32.totalorder %v37, 0
  %v120 = vsub.s32 0, %v37
  %v121 = vsel %vm119, %v120, %v37
  %v122 = vshrl.u32 %v121, 3
  %v123 = vand.u32 %v121, 7
  %v124 = vsub.s32 0, %v123
  %v125 = vsel %vm119, %v124, %v123
  %vm126 = vcmp.lt.s32.totalorder %v38, 0
  %v127 = vsub.s32 0, %v38
  %v128 = vsel %vm126, %v127, %v38
  %v129 = vshrl.u32 %v128, 3
  %v130 = vand.u32 %v128, 7
  %v131 = vsub.s32 0, %v130
  %v132 = vsel %vm126, %v131, %v130
  %vm133 = vcmp.lt.s32.totalorder %v39, 0
  %v134 = vsub.s32 0, %v39
  %v135 = vsel %vm133, %v134, %v39
  %v136 = vshrl.u32 %v135, 3
  %v137 = vand.u32 %v135, 7
  %v138 = vsub.s32 0, %v137
  %v139 = vsel %vm133, %v138, %v137
  %vm140 = vcmp.lt.s32.totalorder %v40, 0
  %v141 = vsub.s32 0, %v40
  %v142 = vsel %vm140, %v141, %v40
  %v143 = vshrl.u32 %v142, 3
  %v144 = vand.u32 %v142, 7
  %v145 = vsub.s32 0, %v144
  %v146 = vsel %vm140, %v145, %v144
  %vm147 = vcmp.lt.s32.totalorder %v41, 0
  %v148 = vsub.s32 0, %v41
  %v149 = vsel %vm147, %v148, %v41
  %v150 = vshrl.u32 %v149, 3
  %v151 = vand.u32 %v149, 7
  %v152 = vsub.s32 0, %v151
  %v153 = vsel %vm147, %v152, %v151
  %vm154 = vcmp.ne.s32.totalorder %v48, 0
  %vm155 = vcmp.ne.s32.totalorder %v55, 0
  %vm156 = vcmp.ne.s32.totalorder %v62, 0
  %vm157 = vcmp.ne.s32.totalorder %v69, 0
  %vm158 = vcmp.ne.s32.totalorder %v76, 0
  %vm159 = vcmp.ne.s32.totalorder %v83, 0
  %vm160 = vcmp.ne.s32.totalorder %v90, 0
  %vm161 = vcmp.ne.s32.totalorder %v97, 0
  %vm162 = vcmp.ne.s32.totalorder %v104, 0
  %vm163 = vcmp.ne.s32.totalorder %v111, 0
  %vm164 = vcmp.ne.s32.totalorder %v118, 0
  %vm165 = vcmp.ne.s32.totalorder %v125, 0
  %vm166 = vcmp.ne.s32.totalorder %v132, 0
  %vm167 = vcmp.ne.s32.totalorder %v139, 0
  %vm168 = vcmp.ne.s32.totalorder %v146, 0
  %vm169 = vcmp.ne.s32.totalorder %v153, 0
  %vm170 = vcmp.lt.s32.totalorder %v48, 0
  %vm171 = vcmp.lt.s32.totalorder %v55, 0
  %vm172 = vcmp.lt.s32.totalorder %v62, 0
  %vm173 = vcmp.lt.s32.totalorder %v69, 0
  %vm174 = vcmp.lt.s32.totalorder %v76, 0
  %vm175 = vcmp.lt.s32.totalorder %v83, 0
  %vm176 = vcmp.lt.s32.totalorder %v90, 0
  %vm177 = vcmp.lt.s32.totalorder %v97, 0
  %vm178 = vcmp.lt.s32.totalorder %v104, 0
  %vm179 = vcmp.lt.s32.totalorder %v111, 0
  %vm180 = vcmp.lt.s32.totalorder %v118, 0
  %vm181 = vcmp.lt.s32.totalorder %v125, 0
  %vm182 = vcmp.lt.s32.totalorder %v132, 0
  %vm183 = vcmp.lt.s32.totalorder %v139, 0
  %vm184 = vcmp.lt.s32.totalorder %v146, 0
  %vm185 = vcmp.lt.s32.totalorder %v153, 0
  %vm186 = vmand %vm170, %vm154
  %vm187 = vmand %vm171, %vm155
  %vm188 = vmand %vm172, %vm156
  %vm189 = vmand %vm173, %vm157
  %vm190 = vmand %vm174, %vm158
  %vm191 = vmand %vm175, %vm159
  %vm192 = vmand %vm176, %vm160
  %vm193 = vmand %vm177, %vm161
  %vm194 = vmand %vm178, %vm162
  %vm195 = vmand %vm179, %vm163
  %vm196 = vmand %vm180, %vm164
  %vm197 = vmand %vm181, %vm165
  %vm198 = vmand %vm182, %vm166
  %vm199 = vmand %vm183, %vm167
  %vm200 = vmand %vm184, %vm168
  %vm201 = vmand %vm185, %vm169
  %v202 = vadd.s32 %v48, 8
  %v203 = vadd.s32 %v55, 8
  %v204 = vadd.s32 %v62, 8
  %v205 = vadd.s32 %v69, 8
  %v206 = vadd.s32 %v76, 8
  %v207 = vadd.s32 %v83, 8
  %v208 = vadd.s32 %v90, 8
  %v209 = vadd.s32 %v97, 8
  %v210 = vadd.s32 %v104, 8
  %v211 = vadd.s32 %v111, 8
  %v212 = vadd.s32 %v118, 8
  %v213 = vadd.s32 %v125, 8
  %v214 = vadd.s32 %v132, 8
  %v215 = vadd.s32 %v139, 8
  %v216 = vadd.s32 %v146, 8
  %v217 = vadd.s32 %v153, 8
  %v218 = vsel %vm186, %v202, %v48
  %v219 = vsel %vm187, %v203, %v55
  %v220 = vsel %vm188, %v204, %v62
  %v221 = vsel %vm189, %v205, %v69
  %v222 = vsel %vm190, %v206, %v76
  %v223 = vsel %vm191, %v207, %v83
  %v224 = vsel %vm192, %v208, %v90
  %v225 = vsel %vm193, %v209, %v97
  %v226 = vsel %vm194, %v210, %v104
  %v227 = vsel %vm195, %v211, %v111
  %v228 = vsel %vm196, %v212, %v118
  %v229 = vsel %vm197, %v213, %v125
  %v230 = vsel %vm198, %v214, %v132
  %v231 = vsel %vm199, %v215, %v139
  %v232 = vsel %vm200, %v216, %v146
  %v233 = vsel %vm201, %v217, %v153
  %v234 = vlaneseq
  %v235 = vand.u32 %v234, 127
  %vm236 = vcmp.lt.s32.totalorder %v235, 0
  %v237 = vsub.s32 0, %v235
  %v238 = vsel %vm236, %v237, %v235
  %v239 = vshrl.u32 %v238, 3
  %v240 = vand.u32 %v238, 7
  %v241 = vsub.s32 0, %v240
  %v242 = vsel %vm236, %v241, %v240
  %vm243 = vcmp.ne.s32.totalorder %v242, 0
  %vm244 = vcmp.lt.s32.totalorder %v242, 0
  %vm245 = vmand %vm244, %vm243
  %v246 = vadd.s32 %v242, 8
  %v247 = vsel %vm245, %v246, %v242
  %vm248 = vcmp.eq.s32.totalorder %v218, %v247
  %vm249 = vcmp.eq.s32.totalorder %v219, %v247
  %vm250 = vcmp.eq.s32.totalorder %v220, %v247
  %vm251 = vcmp.eq.s32.totalorder %v221, %v247
  %vm252 = vcmp.eq.s32.totalorder %v222, %v247
  %vm253 = vcmp.eq.s32.totalorder %v223, %v247
  %vm254 = vcmp.eq.s32.totalorder %v224, %v247
  %vm255 = vcmp.eq.s32.totalorder %v225, %v247
  %vm256 = vcmp.eq.s32.totalorder %v226, %v247
  %vm257 = vcmp.eq.s32.totalorder %v227, %v247
  %vm258 = vcmp.eq.s32.totalorder %v228, %v247
  %vm259 = vcmp.eq.s32.totalorder %v229, %v247
  %vm260 = vcmp.eq.s32.totalorder %v230, %v247
  %vm261 = vcmp.eq.s32.totalorder %v231, %v247
  %vm262 = vcmp.eq.s32.totalorder %v232, %v247
  %vm263 = vcmp.eq.s32.totalorder %v233, %v247
  %v264 = vsel %vm248, 1, 0
  %v265 = vsel %vm249, 1, 0
  %v266 = vsel %vm250, 1, 0
  %v267 = vsel %vm251, 1, 0
  %v268 = vsel %vm252, 1, 0
  %v269 = vsel %vm253, 1, 0
  %v270 = vsel %vm254, 1, 0
  %v271 = vsel %vm255, 1, 0
  %v272 = vsel %vm256, 1, 0
  %v273 = vsel %vm257, 1, 0
  %v274 = vsel %vm258, 1, 0
  %v275 = vsel %vm259, 1, 0
  %v276 = vsel %vm260, 1, 0
  %v277 = vsel %vm261, 1, 0
  %v278 = vsel %vm262, 1, 0
  %v279 = vsel %vm263, 1, 0
  %v280 = vcvt.s32.f32 %v264
  %v281 = vcvt.s32.f32 %v265
  %v282 = vcvt.s32.f32 %v266
  %v283 = vcvt.s32.f32 %v267
  %v284 = vcvt.s32.f32 %v268
  %v285 = vcvt.s32.f32 %v269
  %v286 = vcvt.s32.f32 %v270
  %v287 = vcvt.s32.f32 %v271
  %v288 = vcvt.s32.f32 %v272
  %v289 = vcvt.s32.f32 %v273
  %v290 = vcvt.s32.f32 %v274
  %v291 = vcvt.s32.f32 %v275
  %v292 = vcvt.s32.f32 %v276
  %v293 = vcvt.s32.f32 %v277
  %v294 = vcvt.s32.f32 %v278
  %v295 = vcvt.s32.f32 %v279
  %vm296 = vcmp.lt.s32.totalorder %v26, 0
  %v297 = vsub.s32 0, %v26
  %v298 = vsel %vm296, %v297, %v26
  %v299 = vshrl.u32 %v298, 4
  %v300 = vand.u32 %v298, 15
  %v301 = vsub.s32 0, %v300
  %v302 = vsel %vm296, %v301, %v300
  %vm303 = vcmp.lt.s32.totalorder %v27, 0
  %v304 = vsub.s32 0, %v27
  %v305 = vsel %vm303, %v304, %v27
  %v306 = vshrl.u32 %v305, 4
  %v307 = vand.u32 %v305, 15
  %v308 = vsub.s32 0, %v307
  %v309 = vsel %vm303, %v308, %v307
  %vm310 = vcmp.lt.s32.totalorder %v28, 0
  %v311 = vsub.s32 0, %v28
  %v312 = vsel %vm310, %v311, %v28
  %v313 = vshrl.u32 %v312, 4
  %v314 = vand.u32 %v312, 15
  %v315 = vsub.s32 0, %v314
  %v316 = vsel %vm310, %v315, %v314
  %vm317 = vcmp.lt.s32.totalorder %v29, 0
  %v318 = vsub.s32 0, %v29
  %v319 = vsel %vm317, %v318, %v29
  %v320 = vshrl.u32 %v319, 4
  %v321 = vand.u32 %v319, 15
  %v322 = vsub.s32 0, %v321
  %v323 = vsel %vm317, %v322, %v321
  %vm324 = vcmp.ne.s32.totalorder %v302, 0
  %vm325 = vcmp.ne.s32.totalorder %v309, 0
  %vm326 = vcmp.ne.s32.totalorder %v316, 0
  %vm327 = vcmp.ne.s32.totalorder %v323, 0
  %vm328 = vcmp.lt.s32.totalorder %v302, 0
  %vm329 = vcmp.lt.s32.totalorder %v309, 0
  %vm330 = vcmp.lt.s32.totalorder %v316, 0
  %vm331 = vcmp.lt.s32.totalorder %v323, 0
  %vm332 = vmand %vm328, %vm324
  %vm333 = vmand %vm329, %vm325
  %vm334 = vmand %vm330, %vm326
  %vm335 = vmand %vm331, %vm327
  %v336 = vadd.s32 %v302, 16
  %v337 = vadd.s32 %v309, 16
  %v338 = vadd.s32 %v316, 16
  %v339 = vadd.s32 %v323, 16
  %v340 = vsel %vm332, %v336, %v302
  %v341 = vsel %vm333, %v337, %v309
  %v342 = vsel %vm334, %v338, %v316
  %v343 = vsel %vm335, %v339, %v323
  %vm344 = vcmp.gt.s32.totalorder %v340, 0
  %vm345 = vcmp.gt.s32.totalorder %v341, 0
  %vm346 = vcmp.gt.s32.totalorder %v342, 0
  %vm347 = vcmp.gt.s32.totalorder %v343, 0
  %v348 = vsel %vm344, 1, 0
  %v349 = vsel %vm345, 1, 0
  %v350 = vsel %vm346, 1, 0
  %v351 = vsel %vm347, 1, 0
  %v352 = vcvt.s32.f32 %v348
  %v353 = vcvt.s32.f32 %v349
  %v354 = vcvt.s32.f32 %v350
  %v355 = vcvt.s32.f32 %v351
  %vm356 = vcmp.lt.s32.totalorder %v340, 15
  %vm357 = vcmp.lt.s32.totalorder %v341, 15
  %vm358 = vcmp.lt.s32.totalorder %v342, 15
  %vm359 = vcmp.lt.s32.totalorder %v343, 15
  %v360 = vsel %vm356, 1, 0
  %v361 = vsel %vm357, 1, 0
  %v362 = vsel %vm358, 1, 0
  %v363 = vsel %vm359, 1, 0
  %v364 = vcvt.s32.f32 %v360
  %v365 = vcvt.s32.f32 %v361
  %v366 = vcvt.s32.f32 %v362
  %v367 = vcvt.s32.f32 %v363
  %v368 = vrot.slane %v20, 7
  %v369 = vrot.slane %v21, 7
  %v370 = vrot.slane %v22, 7
  %v371 = vrot.slane %v23, 7
  %vm372 = vcmp.lt.s32.totalorder %v26, 1
  %v373 = vsel %vm372, %v370, %v371
  %v374 = vsel %vm372, %v369, %v370
  %v375 = vsel %vm372, %v368, %v369
  %v376 = vsel %vm372, %v371, %v368
  %v377 = vmul.f32 %v376, %v352
  %v378 = vmul.f32 %v375, %v353
  %v379 = vmul.f32 %v374, %v354
  %v380 = vmul.f32 %v373, %v355
  %v381 = vrot.slane %v20, 1
  %v382 = vrot.slane %v21, 1
  %v383 = vrot.slane %v22, 1
  %v384 = vrot.slane %v23, 1
  %vm385 = vcmp.lt.s32.totalorder %v26, 7
  %v386 = vsel %vm385, %v383, %v384
  %v387 = vsel %vm385, %v382, %v383
  %v388 = vsel %vm385, %v381, %v382
  %v389 = vsel %vm385, %v384, %v381
  %v390 = vmul.f32 %v388, %v364
  %v391 = vmul.f32 %v387, %v365
  %v392 = vmul.f32 %v386, %v366
  %v393 = vmul.f32 %v389, %v367
  %v394 = vld [vmem:[%s2] sm:$0xff]
  %v395 = vld [vmem:[%s2 + $0x8] sm:$0xff]
  %v396 = vld [vmem:[%s2 + $0x10] sm:$0xff]
  %v397 = vld [vmem:[%s2 + $0x18] sm:$0xff]
  %v398 = vld [vmem:[%s2 + $0x20] sm:$0xff]
  %v399 = vld [vmem:[%s2 + $0x28] sm:$0xff]
  %v400 = vld [vmem:[%s2 + $0x30] sm:$0xff]
  %v401 = vld [vmem:[%s2 + $0x38] sm:$0xff]
  %v402 = vld [vmem:[%s2 + $0x40] sm:$0xff]
  %v403 = vld [vmem:[%s2 + $0x48] sm:$0xff]
  %v404 = vld [vmem:[%s2 + $0x50] sm:$0xff]
  %v405 = vld [vmem:[%s2 + $0x58] sm:$0xff]
  %v406 = vld [vmem:[%s2 + $0x60] sm:$0xff]
  %v407 = vld [vmem:[%s2 + $0x68] sm:$0xff]
  %v408 = vld [vmem:[%s2 + $0x70] sm:$0xff]
  %v409 = vld [vmem:[%s2 + $0x78] sm:$0xff]
  %v410 = vld [vmem:[%s1] sm:$0xff]
  %v411 = vld [vmem:[%s1 + $0x8] sm:$0xff]
  %v412 = vld [vmem:[%s1 + $0x10] sm:$0xff]
  %v413 = vld [vmem:[%s1 + $0x18] sm:$0xff]
  %v414 = vld [vmem:[%s1 + $0x20] sm:$0xff]
  %v415 = vld [vmem:[%s1 + $0x28] sm:$0xff]
  %v416 = vld [vmem:[%s1 + $0x30] sm:$0xff]
  %v417 = vld [vmem:[%s1 + $0x38] sm:$0xff]
  %v418 = vld [vmem:[%s1 + $0x40] sm:$0xff]
  %v419 = vld [vmem:[%s1 + $0x48] sm:$0xff]
  %v420 = vld [vmem:[%s1 + $0x50] sm:$0xff]
  %v421 = vld [vmem:[%s1 + $0x58] sm:$0xff]
  %v422 = vld [vmem:[%s1 + $0x60] sm:$0xff]
  %v423 = vld [vmem:[%s1 + $0x68] sm:$0xff]
  %v424 = vld [vmem:[%s1 + $0x70] sm:$0xff]
  %v425 = vld [vmem:[%s1 + $0x78] sm:$0xff]
  %vm426 = vcmask 523264
  %v428 = vsel %vm426, %v20, 0
  %v431 = vsel %vm426, %v21, 0
  %v434 = vsel %vm426, %v22, 0
  %v437 = vsel %vm426, %v23, 0
  %439 = vmatprep.subr.mxu0 %v411
  %440 = vmatpush1.msra.mxu0 %v410
  %441 = vmatprep.subr.mxu0 %v413
  %442 = vmatpush1.msra.mxu0 %v412
  %443 = vmatprep.subr.mxu0 %v415
  %444 = vmatpush1.msra.mxu0 %v414
  %445 = vmatprep.subr.mxu0 %v417
  %446 = vmatpush1.msra.mxu0 %v416
  %447 = vmatprep.subr.mxu0 %v419
  %448 = vmatpush1.msra.mxu0 %v418
  %449 = vmatprep.subr.mxu0 %v421
  %450 = vmatpush1.msra.mxu0 %v420
  %451 = vmatprep.subr.mxu0 %v423
  %452 = vmatpush1.msra.mxu0 %v422
  %453 = vmatprep.subr.mxu0 %v425
  %454 = vmatpush1.msra.mxu0 %v424
  %455 = vmatprep.subr.mxu0 0.0
  %456 = vmatpush1.msra.mxu0 0.0
  %457 = vmatprep.subr.mxu0 0.0
  %458 = vmatpush1.msra.mxu0 0.0
  %459 = vmatprep.subr.mxu0 0.0
  %460 = vmatpush1.msra.mxu0 0.0
  %461 = vmatprep.subr.mxu0 0.0
  %462 = vmatpush1.msra.mxu0 0.0
  %463 = vmatprep.subr.mxu0 0.0
  %464 = vmatpush1.msra.mxu0 0.0
  %465 = vmatprep.subr.mxu0 0.0
  %466 = vmatpush1.msra.mxu0 0.0
  %467 = vmatprep.subr.mxu0 0.0
  %468 = vmatpush1.msra.mxu0 0.0
  %469 = vmatprep.subr.mxu0 0.0
  %470 = vmatpush1.msra.mxu0 0.0
  %471 = vmatprep.subr.mxu0 0.0
  %472 = vmatpush1.msra.mxu0 0.0
  %473 = vmatprep.subr.mxu0 0.0
  %474 = vmatpush1.msra.mxu0 0.0
  %475 = vmatprep.subr.mxu0 0.0
  %476 = vmatpush1.msra.mxu0 0.0
  %477 = vmatprep.subr.mxu0 0.0
  %478 = vmatpush1.msra.mxu0 0.0
  %479 = vmatprep.subr.mxu0 0.0
  %480 = vmatpush1.msra.mxu0 0.0
  %481 = vmatprep.subr.mxu0 0.0
  %482 = vmatpush1.msra.mxu0 0.0
  %483 = vmatprep.subr.mxu0 0.0
  %484 = vmatpush1.msra.mxu0 0.0
  %485 = vmatprep.subr.mxu0 0.0
  %486 = vmatpush1.msra.mxu0 0.0
  %487 = vmatprep.subr.mxu0 0.0
  %488 = vmatpush1.msra.mxu0 0.0
  %489 = vmatprep.subr.mxu0 0.0
  %490 = vmatpush1.msra.mxu0 0.0
  %491 = vmatprep.subr.mxu0 0.0
  %492 = vmatpush1.msra.mxu0 0.0
  %493 = vmatprep.subr.mxu0 0.0
  %494 = vmatpush1.msra.mxu0 0.0
  %495 = vmatprep.subr.mxu0 0.0
  %496 = vmatpush1.msra.mxu0 0.0
  %497 = vmatprep.subr.mxu0 0.0
  %498 = vmatpush1.msra.mxu0 0.0
  %499 = vmatprep.subr.mxu0 0.0
  %500 = vmatpush1.msra.mxu0 0.0
  %501 = vmatprep.subr.mxu0 0.0
  %502 = vmatpush1.msra.mxu0 0.0
  %503 = vmatprep.mubr.f32.mxu0 0.0
  %504 = vmatmul.mubr.f32.gmra.mrb[0].mxu0 %v428
  %v505 = vpop.f32.mrb[0].mxu0
  %v506 = vadd.f32 0.0, %v505
  %v507 = vpop.f32.mrb[0].mxu0
  %v508 = vadd.f32 0.0, %v507
  %509 = vmatprep.mubr.f32.mxu0 0.0
  %510 = vmatmul.mubr.f32.gmra.mrb[0].mxu0 %v431
  %v511 = vpop.f32.mrb[0].mxu0
  %v512 = vadd.f32 0.0, %v511
  %v513 = vpop.f32.mrb[0].mxu0
  %v514 = vadd.f32 0.0, %v513
  %515 = vmatprep.mubr.f32.mxu0 0.0
  %516 = vmatmul.mubr.f32.gmra.mrb[0].mxu0 %v434
  %v517 = vpop.f32.mrb[0].mxu0
  %v518 = vadd.f32 0.0, %v517
  %v519 = vpop.f32.mrb[0].mxu0
  %v520 = vadd.f32 0.0, %v519
  %521 = vmatprep.mubr.f32.mxu0 0.0
  %522 = vmatmul.mubr.f32.gmra.mrb[0].mxu0 %v437
  %v523 = vpop.f32.mrb[0].mxu0
  %v524 = vadd.f32 0.0, %v523
  %v525 = vpop.f32.mrb[0].mxu0
  %v526 = vadd.f32 0.0, %v525
  %527 = vdwg.mxu0
  %v529 = vsel %vm426, %v377, 0
  %v532 = vsel %vm426, %v378, 0
  %v535 = vsel %vm426, %v379, 0
  %v538 = vsel %vm426, %v380, 0
  %540 = vmatprep.subr.mxu0 0.0
  %541 = vmatpush1.msra.mxu0 %v394
  %542 = vmatprep.subr.mxu0 0.0
  %543 = vmatpush1.msra.mxu0 %v395
  %544 = vmatprep.subr.mxu0 0.0
  %545 = vmatpush1.msra.mxu0 %v396
  %546 = vmatprep.subr.mxu0 0.0
  %547 = vmatpush1.msra.mxu0 %v397
  %548 = vmatprep.subr.mxu0 0.0
  %549 = vmatpush1.msra.mxu0 %v398
  %550 = vmatprep.subr.mxu0 0.0
  %551 = vmatpush1.msra.mxu0 %v399
  %552 = vmatprep.subr.mxu0 0.0
  %553 = vmatpush1.msra.mxu0 %v400
  %554 = vmatprep.subr.mxu0 0.0
  %555 = vmatpush1.msra.mxu0 %v401
  %556 = vmatprep.subr.mxu0 0.0
  %557 = vmatpush1.msra.mxu0 0.0
  %558 = vmatprep.subr.mxu0 0.0
  %559 = vmatpush1.msra.mxu0 0.0
  %560 = vmatprep.subr.mxu0 0.0
  %561 = vmatpush1.msra.mxu0 0.0
  %562 = vmatprep.subr.mxu0 0.0
  %563 = vmatpush1.msra.mxu0 0.0
  %564 = vmatprep.subr.mxu0 0.0
  %565 = vmatpush1.msra.mxu0 0.0
  %566 = vmatprep.subr.mxu0 0.0
  %567 = vmatpush1.msra.mxu0 0.0
  %568 = vmatprep.subr.mxu0 0.0
  %569 = vmatpush1.msra.mxu0 0.0
  %570 = vmatprep.subr.mxu0 0.0
  %571 = vmatpush1.msra.mxu0 0.0
  %572 = vmatprep.subr.mxu0 0.0
  %573 = vmatpush1.msra.mxu0 0.0
  %574 = vmatprep.subr.mxu0 0.0
  %575 = vmatpush1.msra.mxu0 0.0
  %576 = vmatprep.subr.mxu0 0.0
  %577 = vmatpush1.msra.mxu0 0.0
  %578 = vmatprep.subr.mxu0 0.0
  %579 = vmatpush1.msra.mxu0 0.0
  %580 = vmatprep.subr.mxu0 0.0
  %581 = vmatpush1.msra.mxu0 0.0
  %582 = vmatprep.subr.mxu0 0.0
  %583 = vmatpush1.msra.mxu0 0.0
  %584 = vmatprep.subr.mxu0 0.0
  %585 = vmatpush1.msra.mxu0 0.0
  %586 = vmatprep.subr.mxu0 0.0
  %587 = vmatpush1.msra.mxu0 0.0
  %588 = vmatprep.subr.mxu0 0.0
  %589 = vmatpush1.msra.mxu0 0.0
  %590 = vmatprep.subr.mxu0 0.0
  %591 = vmatpush1.msra.mxu0 0.0
  %592 = vmatprep.subr.mxu0 0.0
  %593 = vmatpush1.msra.mxu0 0.0
  %594 = vmatprep.subr.mxu0 0.0
  %595 = vmatpush1.msra.mxu0 0.0
  %596 = vmatprep.subr.mxu0 0.0
  %597 = vmatpush1.msra.mxu0 0.0
  %598 = vmatprep.subr.mxu0 0.0
  %599 = vmatpush1.msra.mxu0 0.0
  %600 = vmatprep.subr.mxu0 0.0
  %601 = vmatpush1.msra.mxu0 0.0
  %602 = vmatprep.subr.mxu0 0.0
  %603 = vmatpush1.msra.mxu0 0.0
  %604 = vmatprep.mubr.f32.mxu0 0.0
  %605 = vmatmul.mubr.f32.gmra.mrb[0].mxu0 %v529
  %v606 = vpop.f32.mrb[0].mxu0
  %v607 = vadd.f32 0.0, %v606
  %v608 = vpop.f32.mrb[0].mxu0
  %609 = vmatprep.mubr.f32.mxu0 0.0
  %610 = vmatmul.mubr.f32.gmra.mrb[0].mxu0 %v532
  %v611 = vpop.f32.mrb[0].mxu0
  %v612 = vadd.f32 0.0, %v611
  %v613 = vpop.f32.mrb[0].mxu0
  %614 = vmatprep.mubr.f32.mxu0 0.0
  %615 = vmatmul.mubr.f32.gmra.mrb[0].mxu0 %v535
  %v616 = vpop.f32.mrb[0].mxu0
  %v617 = vadd.f32 0.0, %v616
  %v618 = vpop.f32.mrb[0].mxu0
  %619 = vmatprep.mubr.f32.mxu0 0.0
  %620 = vmatmul.mubr.f32.gmra.mrb[0].mxu0 %v538
  %v621 = vpop.f32.mrb[0].mxu0
  %v622 = vadd.f32 0.0, %v621
  %v623 = vpop.f32.mrb[0].mxu0
  %624 = vdwg.mxu0
  %v625 = vadd.f32 %v506, %v607
  %v626 = vadd.f32 %v512, %v612
  %v627 = vadd.f32 %v518, %v617
  %v628 = vadd.f32 %v524, %v622
  %v630 = vsel %vm426, %v390, 0
  %v633 = vsel %vm426, %v391, 0
  %v636 = vsel %vm426, %v392, 0
  %v639 = vsel %vm426, %v393, 0
  %641 = vmatprep.subr.mxu0 0.0
  %642 = vmatpush1.msra.mxu0 %v402
  %643 = vmatprep.subr.mxu0 0.0
  %644 = vmatpush1.msra.mxu0 %v403
  %645 = vmatprep.subr.mxu0 0.0
  %646 = vmatpush1.msra.mxu0 %v404
  %647 = vmatprep.subr.mxu0 0.0
  %648 = vmatpush1.msra.mxu0 %v405
  %649 = vmatprep.subr.mxu0 0.0
  %650 = vmatpush1.msra.mxu0 %v406
  %651 = vmatprep.subr.mxu0 0.0
  %652 = vmatpush1.msra.mxu0 %v407
  %653 = vmatprep.subr.mxu0 0.0
  %654 = vmatpush1.msra.mxu0 %v408
  %655 = vmatprep.subr.mxu0 0.0
  %656 = vmatpush1.msra.mxu0 %v409
  %657 = vmatprep.subr.mxu0 0.0
  %658 = vmatpush1.msra.mxu0 0.0
  %659 = vmatprep.subr.mxu0 0.0
  %660 = vmatpush1.msra.mxu0 0.0
  %661 = vmatprep.subr.mxu0 0.0
  %662 = vmatpush1.msra.mxu0 0.0
  %663 = vmatprep.subr.mxu0 0.0
  %664 = vmatpush1.msra.mxu0 0.0
  %665 = vmatprep.subr.mxu0 0.0
  %666 = vmatpush1.msra.mxu0 0.0
  %667 = vmatprep.subr.mxu0 0.0
  %668 = vmatpush1.msra.mxu0 0.0
  %669 = vmatprep.subr.mxu0 0.0
  %670 = vmatpush1.msra.mxu0 0.0
  %671 = vmatprep.subr.mxu0 0.0
  %672 = vmatpush1.msra.mxu0 0.0
  %673 = vmatprep.subr.mxu0 0.0
  %674 = vmatpush1.msra.mxu0 0.0
  %675 = vmatprep.subr.mxu0 0.0
  %676 = vmatpush1.msra.mxu0 0.0
  %677 = vmatprep.subr.mxu0 0.0
  %678 = vmatpush1.msra.mxu0 0.0
  %679 = vmatprep.subr.mxu0 0.0
  %680 = vmatpush1.msra.mxu0 0.0
  %681 = vmatprep.subr.mxu0 0.0
  %682 = vmatpush1.msra.mxu0 0.0
  %683 = vmatprep.subr.mxu0 0.0
  %684 = vmatpush1.msra.mxu0 0.0
  %685 = vmatprep.subr.mxu0 0.0
  %686 = vmatpush1.msra.mxu0 0.0
  %687 = vmatprep.subr.mxu0 0.0
  %688 = vmatpush1.msra.mxu0 0.0
  %689 = vmatprep.subr.mxu0 0.0
  %690 = vmatpush1.msra.mxu0 0.0
  %691 = vmatprep.subr.mxu0 0.0
  %692 = vmatpush1.msra.mxu0 0.0
  %693 = vmatprep.subr.mxu0 0.0
  %694 = vmatpush1.msra.mxu0 0.0
  %695 = vmatprep.subr.mxu0 0.0
  %696 = vmatpush1.msra.mxu0 0.0
  %697 = vmatprep.subr.mxu0 0.0
  %698 = vmatpush1.msra.mxu0 0.0
  %699 = vmatprep.subr.mxu0 0.0
  %700 = vmatpush1.msra.mxu0 0.0
  %701 = vmatprep.subr.mxu0 0.0
  %702 = vmatpush1.msra.mxu0 0.0
  %703 = vmatprep.subr.mxu0 0.0
  %704 = vmatpush1.msra.mxu0 0.0
  %705 = vmatprep.mubr.f32.mxu0 0.0
  %706 = vmatmul.mubr.f32.gmra.mrb[0].mxu0 %v630
  %v707 = vpop.f32.mrb[0].mxu0
  %v708 = vadd.f32 0.0, %v707
  %v709 = vpop.f32.mrb[0].mxu0
  %710 = vmatprep.mubr.f32.mxu0 0.0
  %711 = vmatmul.mubr.f32.gmra.mrb[0].mxu0 %v633
  %v712 = vpop.f32.mrb[0].mxu0
  %v713 = vadd.f32 0.0, %v712
  %v714 = vpop.f32.mrb[0].mxu0
  %715 = vmatprep.mubr.f32.mxu0 0.0
  %716 = vmatmul.mubr.f32.gmra.mrb[0].mxu0 %v636
  %v717 = vpop.f32.mrb[0].mxu0
  %v718 = vadd.f32 0.0, %v717
  %v719 = vpop.f32.mrb[0].mxu0
  %720 = vmatprep.mubr.f32.mxu0 0.0
  %721 = vmatmul.mubr.f32.gmra.mrb[0].mxu0 %v639
  %v722 = vpop.f32.mrb[0].mxu0
  %v723 = vadd.f32 0.0, %v722
  %v724 = vpop.f32.mrb[0].mxu0
  %725 = vdwg.mxu0
  %v726 = vadd.f32 %v625, %v708
  %v727 = vadd.f32 %v626, %v713
  %v728 = vadd.f32 %v627, %v718
  %v729 = vadd.f32 %v628, %v723
  %v730 = vadd.f32 %v726, %v727
  %v731 = vadd.f32 %v730, %v728
  %v732 = vadd.f32 %v731, %v729
  %v733 = vrot.slane %v732, 4
  %v734 = vadd.f32 %v732, %v733
  %v735 = vrot.slane %v734, 2
  %v736 = vadd.f32 %v734, %v735
  %v737 = vrot.slane %v736, 1
  %v738 = vadd.f32 %v736, %v737
  %739 = vmatprep.subr.mxu0 0.0
  %740 = vmatpush1.msra.mxu0 %v280
  %741 = vmatprep.subr.mxu0 0.0
  %742 = vmatpush1.msra.mxu0 %v281
  %743 = vmatprep.subr.mxu0 0.0
  %744 = vmatpush1.msra.mxu0 %v282
  %745 = vmatprep.subr.mxu0 0.0
  %746 = vmatpush1.msra.mxu0 %v283
  %747 = vmatprep.subr.mxu0 0.0
  %748 = vmatpush1.msra.mxu0 %v284
  %749 = vmatprep.subr.mxu0 0.0
  %750 = vmatpush1.msra.mxu0 %v285
  %751 = vmatprep.subr.mxu0 0.0
  %752 = vmatpush1.msra.mxu0 %v286
  %753 = vmatprep.subr.mxu0 0.0
  %754 = vmatpush1.msra.mxu0 %v287
  %755 = vmatprep.subr.mxu0 0.0
  %756 = vmatpush1.msra.mxu0 %v288
  %757 = vmatprep.subr.mxu0 0.0
  %758 = vmatpush1.msra.mxu0 %v289
  %759 = vmatprep.subr.mxu0 0.0
  %760 = vmatpush1.msra.mxu0 %v290
  %761 = vmatprep.subr.mxu0 0.0
  %762 = vmatpush1.msra.mxu0 %v291
  %763 = vmatprep.subr.mxu0 0.0
  %764 = vmatpush1.msra.mxu0 %v292
  %765 = vmatprep.subr.mxu0 0.0
  %766 = vmatpush1.msra.mxu0 %v293
  %767 = vmatprep.subr.mxu0 0.0
  %768 = vmatpush1.msra.mxu0 %v294
  %769 = vmatprep.subr.mxu0 0.0
  %770 = vmatpush1.msra.mxu0 %v295
  %771 = vmatprep.subr.mxu0 0.0
  %772 = vmatpush1.msra.mxu0 0.0
  %773 = vmatprep.subr.mxu0 0.0
  %774 = vmatpush1.msra.mxu0 0.0
  %775 = vmatprep.subr.mxu0 0.0
  %776 = vmatpush1.msra.mxu0 0.0
  %777 = vmatprep.subr.mxu0 0.0
  %778 = vmatpush1.msra.mxu0 0.0
  %779 = vmatprep.subr.mxu0 0.0
  %780 = vmatpush1.msra.mxu0 0.0
  %781 = vmatprep.subr.mxu0 0.0
  %782 = vmatpush1.msra.mxu0 0.0
  %783 = vmatprep.subr.mxu0 0.0
  %784 = vmatpush1.msra.mxu0 0.0
  %785 = vmatprep.subr.mxu0 0.0
  %786 = vmatpush1.msra.mxu0 0.0
  %787 = vmatprep.subr.mxu0 0.0
  %788 = vmatpush1.msra.mxu0 0.0
  %789 = vmatprep.subr.mxu0 0.0
  %790 = vmatpush1.msra.mxu0 0.0
  %791 = vmatprep.subr.mxu0 0.0
  %792 = vmatpush1.msra.mxu0 0.0
  %793 = vmatprep.subr.mxu0 0.0
  %794 = vmatpush1.msra.mxu0 0.0
  %795 = vmatprep.subr.mxu0 0.0
  %796 = vmatpush1.msra.mxu0 0.0
  %797 = vmatprep.subr.mxu0 0.0
  %798 = vmatpush1.msra.mxu0 0.0
  %799 = vmatprep.subr.mxu0 0.0
  %800 = vmatpush1.msra.mxu0 0.0
  %801 = vmatprep.subr.mxu0 0.0
  %802 = vmatpush1.msra.mxu0 0.0
  %803 = vmatprep.mubr.f32.mxu0 0.0
  %804 = vmatmul.mubr.f32.gmra.mrb[0].mxu0 %v738
  %v805 = vpop.f32.mrb[0].mxu0
  %v806 = vadd.f32 0.0, %v805
  %v807 = vpop.f32.mrb[0].mxu0
  %808 = vdwg.mxu0
  %v809 = vmul.f32 %v806, 0.001953125
  %v810 = vlaneseq
  %v811 = vshrl.u32 %v810, 7
  %v812 = vsub.s32 0, %v811
  %v813 = vrot.slane %v809, %v812
  %v814 = vsub.f32 %v726, %v813
  %v815 = vsub.f32 %v727, %v813
  %v816 = vsub.f32 %v728, %v813
  %v817 = vsub.f32 %v729, %v813
  %v818 = vmul.f32 %v814, %v814
  %v819 = vmul.f32 %v815, %v815
  %v820 = vmul.f32 %v816, %v816
  %v821 = vmul.f32 %v817, %v817
  %v822 = vadd.f32 %v818, %v819
  %v823 = vadd.f32 %v822, %v820
  %v824 = vadd.f32 %v823, %v821
  %v825 = vrot.slane %v824, 4
  %v826 = vadd.f32 %v824, %v825
  %v827 = vrot.slane %v826, 2
  %v828 = vadd.f32 %v826, %v827
  %v829 = vrot.slane %v828, 1
  %v830 = vadd.f32 %v828, %v829
  %831 = vmatprep.subr.mxu0 0.0
  %832 = vmatpush1.msra.mxu0 %v280
  %833 = vmatprep.subr.mxu0 0.0
  %834 = vmatpush1.msra.mxu0 %v281
  %835 = vmatprep.subr.mxu0 0.0
  %836 = vmatpush1.msra.mxu0 %v282
  %837 = vmatprep.subr.mxu0 0.0
  %838 = vmatpush1.msra.mxu0 %v283
  %839 = vmatprep.subr.mxu0 0.0
  %840 = vmatpush1.msra.mxu0 %v284
  %841 = vmatprep.subr.mxu0 0.0
  %842 = vmatpush1.msra.mxu0 %v285
  %843 = vmatprep.subr.mxu0 0.0
  %844 = vmatpush1.msra.mxu0 %v286
  %845 = vmatprep.subr.mxu0 0.0
  %846 = vmatpush1.msra.mxu0 %v287
  %847 = vmatprep.subr.mxu0 0.0
  %848 = vmatpush1.msra.mxu0 %v288
  %849 = vmatprep.subr.mxu0 0.0
  %850 = vmatpush1.msra.mxu0 %v289
  %851 = vmatprep.subr.mxu0 0.0
  %852 = vmatpush1.msra.mxu0 %v290
  %853 = vmatprep.subr.mxu0 0.0
  %854 = vmatpush1.msra.mxu0 %v291
  %855 = vmatprep.subr.mxu0 0.0
  %856 = vmatpush1.msra.mxu0 %v292
  %857 = vmatprep.subr.mxu0 0.0
  %858 = vmatpush1.msra.mxu0 %v293
  %859 = vmatprep.subr.mxu0 0.0
  %860 = vmatpush1.msra.mxu0 %v294
  %861 = vmatprep.subr.mxu0 0.0
  %862 = vmatpush1.msra.mxu0 %v295
  %863 = vmatprep.subr.mxu0 0.0
  %864 = vmatpush1.msra.mxu0 0.0
  %865 = vmatprep.subr.mxu0 0.0
  %866 = vmatpush1.msra.mxu0 0.0
  %867 = vmatprep.subr.mxu0 0.0
  %868 = vmatpush1.msra.mxu0 0.0
  %869 = vmatprep.subr.mxu0 0.0
  %870 = vmatpush1.msra.mxu0 0.0
  %871 = vmatprep.subr.mxu0 0.0
  %872 = vmatpush1.msra.mxu0 0.0
  %873 = vmatprep.subr.mxu0 0.0
  %874 = vmatpush1.msra.mxu0 0.0
  %875 = vmatprep.subr.mxu0 0.0
  %876 = vmatpush1.msra.mxu0 0.0
  %877 = vmatprep.subr.mxu0 0.0
  %878 = vmatpush1.msra.mxu0 0.0
  %879 = vmatprep.subr.mxu0 0.0
  %880 = vmatpush1.msra.mxu0 0.0
  %881 = vmatprep.subr.mxu0 0.0
  %882 = vmatpush1.msra.mxu0 0.0
  %883 = vmatprep.subr.mxu0 0.0
  %884 = vmatpush1.msra.mxu0 0.0
  %885 = vmatprep.subr.mxu0 0.0
  %886 = vmatpush1.msra.mxu0 0.0
  %887 = vmatprep.subr.mxu0 0.0
  %888 = vmatpush1.msra.mxu0 0.0
  %889 = vmatprep.subr.mxu0 0.0
  %890 = vmatpush1.msra.mxu0 0.0
  %891 = vmatprep.subr.mxu0 0.0
  %892 = vmatpush1.msra.mxu0 0.0
  %893 = vmatprep.subr.mxu0 0.0
  %894 = vmatpush1.msra.mxu0 0.0
  %895 = vmatprep.mubr.f32.mxu0 0.0
  %896 = vmatmul.mubr.f32.gmra.mrb[0].mxu0 %v830
  %v897 = vpop.f32.mrb[0].mxu0
  %v898 = vadd.f32 0.0, %v897
  %v899 = vpop.f32.mrb[0].mxu0
  %900 = vdwg.mxu0
  %v901 = vmul.f32 %v898, 0.001953125
  %v902 = vadd.f32 %v901, 1e-05
  %v903 = vrsqrt.pop %v902
  %v904 = vmul.f32 %v24, %v903
  %v905 = vlaneseq
  %v906 = vshrl.u32 %v905, 7
  %v907 = vsub.s32 0, %v906
  %v908 = vrot.slane %v904, %v907
  %v909 = vmul.f32 %v814, %v908
  %v910 = vmul.f32 %v815, %v908
  %v911 = vmul.f32 %v816, %v908
  %v912 = vmul.f32 %v817, %v908
  %v913 = vlaneseq
  %v914 = vshrl.u32 %v913, 7
  %v915 = vsub.s32 1, %v914
  %v916 = vrot.slane %v24, %v915
  %v917 = vadd.f32 %v909, %v916
  %v918 = vadd.f32 %v910, %v916
  %v919 = vadd.f32 %v911, %v916
  %v920 = vadd.f32 %v912, %v916
  %v921 = vmax.f32 %v917, 0.0
  %v922 = vmax.f32 %v918, 0.0
  %v923 = vmax.f32 %v919, 0.0
  %v924 = vmax.f32 %v920, 0.0
  %v925 = vld [vmem:[%s3] sm:$0xff]
  %v926 = vld [vmem:[%s3 + $0x8] sm:$0xff]
  %v927 = vld [vmem:[%s3 + $0x10] sm:$0xff]
  %v928 = vld [vmem:[%s3 + $0x18] sm:$0xff]
  %v929 = vld [vmem:[%s3 + $0x20] sm:$0xff]
  %v930 = vld [vmem:[%s3 + $0x28] sm:$0xff]
  %v931 = vld [vmem:[%s3 + $0x30] sm:$0xff]
  %v932 = vld [vmem:[%s3 + $0x38] sm:$0xff]
  %v933 = vld [vmem:[%s3 + $0x40] sm:$0xff]
  %v934 = vld [vmem:[%s3 + $0x48] sm:$0xff]
  %v935 = vld [vmem:[%s3 + $0x50] sm:$0xff]
  %v936 = vld [vmem:[%s3 + $0x58] sm:$0xff]
  %v937 = vld [vmem:[%s3 + $0x60] sm:$0xff]
  %v938 = vld [vmem:[%s3 + $0x68] sm:$0xff]
  %v939 = vld [vmem:[%s3 + $0x70] sm:$0xff]
  %v940 = vld [vmem:[%s3 + $0x78] sm:$0xff]
  %v941 = vld [vmem:[%s3 + $0x80] sm:$0xff]
  %v942 = vld [vmem:[%s3 + $0x88] sm:$0xff]
  %v943 = vld [vmem:[%s3 + $0x90] sm:$0xff]
  %v944 = vld [vmem:[%s3 + $0x98] sm:$0xff]
  %v945 = vld [vmem:[%s3 + $0xa0] sm:$0xff]
  %v946 = vld [vmem:[%s3 + $0xa8] sm:$0xff]
  %v947 = vld [vmem:[%s3 + $0xb0] sm:$0xff]
  %v948 = vld [vmem:[%s3 + $0xb8] sm:$0xff]
  %v949 = vld [vmem:[%s3 + $0xc0] sm:$0xff]
  %v950 = vld [vmem:[%s3 + $0xc8] sm:$0xff]
  %v951 = vld [vmem:[%s3 + $0xd0] sm:$0xff]
  %v952 = vld [vmem:[%s3 + $0xd8] sm:$0xff]
  %v953 = vld [vmem:[%s3 + $0xe0] sm:$0xff]
  %v954 = vld [vmem:[%s3 + $0xe8] sm:$0xff]
  %v955 = vld [vmem:[%s3 + $0xf0] sm:$0xff]
  %v956 = vld [vmem:[%s3 + $0xf8] sm:$0xff]
  %v957 = vld [vmem:[%s3 + $0x100] sm:$0xff]
  %v958 = vld [vmem:[%s3 + $0x108] sm:$0xff]
  %v959 = vld [vmem:[%s3 + $0x110] sm:$0xff]
  %v960 = vld [vmem:[%s3 + $0x118] sm:$0xff]
  %v961 = vld [vmem:[%s3 + $0x120] sm:$0xff]
  %v962 = vld [vmem:[%s3 + $0x128] sm:$0xff]
  %v963 = vld [vmem:[%s3 + $0x130] sm:$0xff]
  %v964 = vld [vmem:[%s3 + $0x138] sm:$0xff]
  %v965 = vld [vmem:[%s3 + $0x140] sm:$0xff]
  %v966 = vld [vmem:[%s3 + $0x148] sm:$0xff]
  %v967 = vld [vmem:[%s3 + $0x150] sm:$0xff]
  %v968 = vld [vmem:[%s3 + $0x158] sm:$0xff]
  %v969 = vld [vmem:[%s3 + $0x160] sm:$0xff]
  %v970 = vld [vmem:[%s3 + $0x168] sm:$0xff]
  %v971 = vld [vmem:[%s3 + $0x170] sm:$0xff]
  %v972 = vld [vmem:[%s3 + $0x178] sm:$0xff]
  %v973 = vrot.slane %v921, 7
  %v974 = vrot.slane %v922, 7
  %v975 = vrot.slane %v923, 7
  %v976 = vrot.slane %v924, 7
  %v977 = vsel %vm372, %v975, %v976
  %v978 = vsel %vm372, %v974, %v975
  %v979 = vsel %vm372, %v973, %v974
  %v980 = vsel %vm372, %v976, %v973
  %v981 = vmul.f32 %v980, %v352
  %v982 = vmul.f32 %v979, %v353
  %v983 = vmul.f32 %v978, %v354
  %v984 = vmul.f32 %v977, %v355
  %v985 = vrot.slane %v921, 1
  %v986 = vrot.slane %v922, 1
  %v987 = vrot.slane %v923, 1
  %v988 = vrot.slane %v924, 1
  %v989 = vsel %vm385, %v987, %v988
  %v990 = vsel %vm385, %v986, %v987
  %v991 = vsel %vm385, %v985, %v986
  %v992 = vsel %vm385, %v988, %v985
  %v993 = vmul.f32 %v991, %v364
  %v994 = vmul.f32 %v990, %v365
  %v995 = vmul.f32 %v989, %v366
  %v996 = vmul.f32 %v992, %v367
  %997 = vmatprep.subr.mxu0 0.0
  %998 = vmatpush1.msra.mxu0 %v941
  %999 = vmatprep.subr.mxu0 0.0
  %1000 = vmatpush1.msra.mxu0 %v942
  %1001 = vmatprep.subr.mxu0 0.0
  %1002 = vmatpush1.msra.mxu0 %v943
  %1003 = vmatprep.subr.mxu0 0.0
  %1004 = vmatpush1.msra.mxu0 %v944
  %1005 = vmatprep.subr.mxu0 0.0
  %1006 = vmatpush1.msra.mxu0 %v945
  %1007 = vmatprep.subr.mxu0 0.0
  %1008 = vmatpush1.msra.mxu0 %v946
  %1009 = vmatprep.subr.mxu0 0.0
  %1010 = vmatpush1.msra.mxu0 %v947
  %1011 = vmatprep.subr.mxu0 0.0
  %1012 = vmatpush1.msra.mxu0 %v948
  %1013 = vmatprep.subr.mxu0 0.0
  %1014 = vmatpush1.msra.mxu0 %v949
  %1015 = vmatprep.subr.mxu0 0.0
  %1016 = vmatpush1.msra.mxu0 %v950
  %1017 = vmatprep.subr.mxu0 0.0
  %1018 = vmatpush1.msra.mxu0 %v951
  %1019 = vmatprep.subr.mxu0 0.0
  %1020 = vmatpush1.msra.mxu0 %v952
  %1021 = vmatprep.subr.mxu0 0.0
  %1022 = vmatpush1.msra.mxu0 %v953
  %1023 = vmatprep.subr.mxu0 0.0
  %1024 = vmatpush1.msra.mxu0 %v954
  %1025 = vmatprep.subr.mxu0 0.0
  %1026 = vmatpush1.msra.mxu0 %v955
  %1027 = vmatprep.subr.mxu0 0.0
  %1028 = vmatpush1.msra.mxu0 %v956
  %1029 = vmatprep.subr.mxu0 0.0
  %1030 = vmatpush1.msra.mxu0 0.0
  %1031 = vmatprep.subr.mxu0 0.0
  %1032 = vmatpush1.msra.mxu0 0.0
  %1033 = vmatprep.subr.mxu0 0.0
  %1034 = vmatpush1.msra.mxu0 0.0
  %1035 = vmatprep.subr.mxu0 0.0
  %1036 = vmatpush1.msra.mxu0 0.0
  %1037 = vmatprep.subr.mxu0 0.0
  %1038 = vmatpush1.msra.mxu0 0.0
  %1039 = vmatprep.subr.mxu0 0.0
  %1040 = vmatpush1.msra.mxu0 0.0
  %1041 = vmatprep.subr.mxu0 0.0
  %1042 = vmatpush1.msra.mxu0 0.0
  %1043 = vmatprep.subr.mxu0 0.0
  %1044 = vmatpush1.msra.mxu0 0.0
  %1045 = vmatprep.subr.mxu0 0.0
  %1046 = vmatpush1.msra.mxu0 0.0
  %1047 = vmatprep.subr.mxu0 0.0
  %1048 = vmatpush1.msra.mxu0 0.0
  %1049 = vmatprep.subr.mxu0 0.0
  %1050 = vmatpush1.msra.mxu0 0.0
  %1051 = vmatprep.subr.mxu0 0.0
  %1052 = vmatpush1.msra.mxu0 0.0
  %1053 = vmatprep.subr.mxu0 0.0
  %1054 = vmatpush1.msra.mxu0 0.0
  %1055 = vmatprep.subr.mxu0 0.0
  %1056 = vmatpush1.msra.mxu0 0.0
  %1057 = vmatprep.subr.mxu0 0.0
  %1058 = vmatpush1.msra.mxu0 0.0
  %1059 = vmatprep.subr.mxu0 0.0
  %1060 = vmatpush1.msra.mxu0 0.0
  %1061 = vmatprep.mubr.f32.mxu0 0.0
  %1062 = vmatmul.mubr.f32.gmra.mrb[0].mxu0 %v921
  %v1063 = vpop.f32.mrb[0].mxu0
  %v1064 = vadd.f32 0.0, %v1063
  %v1065 = vpop.f32.mrb[0].mxu0
  %1066 = vmatprep.mubr.f32.mxu0 0.0
  %1067 = vmatmul.mubr.f32.gmra.mrb[0].mxu0 %v922
  %v1068 = vpop.f32.mrb[0].mxu0
  %v1069 = vadd.f32 0.0, %v1068
  %v1070 = vpop.f32.mrb[0].mxu0
  %1071 = vmatprep.mubr.f32.mxu0 0.0
  %1072 = vmatmul.mubr.f32.gmra.mrb[0].mxu0 %v923
  %v1073 = vpop.f32.mrb[0].mxu0
  %v1074 = vadd.f32 0.0, %v1073
  %v1075 = vpop.f32.mrb[0].mxu0
  %1076 = vmatprep.mubr.f32.mxu0 0.0
  %1077 = vmatmul.mubr.f32.gmra.mrb[0].mxu0 %v924
  %v1078 = vpop.f32.mrb[0].mxu0
  %v1079 = vadd.f32 0.0, %v1078
  %v1080 = vpop.f32.mrb[0].mxu0
  %1081 = vdwg.mxu0
  %1082 = vmatprep.subr.mxu0 0.0
  %1083 = vmatpush1.msra.mxu0 %v925
  %1084 = vmatprep.subr.mxu0 0.0
  %1085 = vmatpush1.msra.mxu0 %v926
  %1086 = vmatprep.subr.mxu0 0.0
  %1087 = vmatpush1.msra.mxu0 %v927
  %1088 = vmatprep.subr.mxu0 0.0
  %1089 = vmatpush1.msra.mxu0 %v928
  %1090 = vmatprep.subr.mxu0 0.0
  %1091 = vmatpush1.msra.mxu0 %v929
  %1092 = vmatprep.subr.mxu0 0.0
  %1093 = vmatpush1.msra.mxu0 %v930
  %1094 = vmatprep.subr.mxu0 0.0
  %1095 = vmatpush1.msra.mxu0 %v931
  %1096 = vmatprep.subr.mxu0 0.0
  %1097 = vmatpush1.msra.mxu0 %v932
  %1098 = vmatprep.subr.mxu0 0.0
  %1099 = vmatpush1.msra.mxu0 %v933
  %1100 = vmatprep.subr.mxu0 0.0
  %1101 = vmatpush1.msra.mxu0 %v934
  %1102 = vmatprep.subr.mxu0 0.0
  %1103 = vmatpush1.msra.mxu0 %v935
  %1104 = vmatprep.subr.mxu0 0.0
  %1105 = vmatpush1.msra.mxu0 %v936
  %1106 = vmatprep.subr.mxu0 0.0
  %1107 = vmatpush1.msra.mxu0 %v937
  %1108 = vmatprep.subr.mxu0 0.0
  %1109 = vmatpush1.msra.mxu0 %v938
  %1110 = vmatprep.subr.mxu0 0.0
  %1111 = vmatpush1.msra.mxu0 %v939
  %1112 = vmatprep.subr.mxu0 0.0
  %1113 = vmatpush1.msra.mxu0 %v940
  %1114 = vmatprep.subr.mxu0 0.0
  %1115 = vmatpush1.msra.mxu0 0.0
  %1116 = vmatprep.subr.mxu0 0.0
  %1117 = vmatpush1.msra.mxu0 0.0
  %1118 = vmatprep.subr.mxu0 0.0
  %1119 = vmatpush1.msra.mxu0 0.0
  %1120 = vmatprep.subr.mxu0 0.0
  %1121 = vmatpush1.msra.mxu0 0.0
  %1122 = vmatprep.subr.mxu0 0.0
  %1123 = vmatpush1.msra.mxu0 0.0
  %1124 = vmatprep.subr.mxu0 0.0
  %1125 = vmatpush1.msra.mxu0 0.0
  %1126 = vmatprep.subr.mxu0 0.0
  %1127 = vmatpush1.msra.mxu0 0.0
  %1128 = vmatprep.subr.mxu0 0.0
  %1129 = vmatpush1.msra.mxu0 0.0
  %1130 = vmatprep.subr.mxu0 0.0
  %1131 = vmatpush1.msra.mxu0 0.0
  %1132 = vmatprep.subr.mxu0 0.0
  %1133 = vmatpush1.msra.mxu0 0.0
  %1134 = vmatprep.subr.mxu0 0.0
  %1135 = vmatpush1.msra.mxu0 0.0
  %1136 = vmatprep.subr.mxu0 0.0
  %1137 = vmatpush1.msra.mxu0 0.0
  %1138 = vmatprep.subr.mxu0 0.0
  %1139 = vmatpush1.msra.mxu0 0.0
  %1140 = vmatprep.subr.mxu0 0.0
  %1141 = vmatpush1.msra.mxu0 0.0
  %1142 = vmatprep.subr.mxu0 0.0
  %1143 = vmatpush1.msra.mxu0 0.0
  %1144 = vmatprep.subr.mxu0 0.0
  %1145 = vmatpush1.msra.mxu0 0.0
  %1146 = vmatprep.mubr.f32.mxu0 0.0
  %1147 = vmatmul.mubr.f32.gmra.mrb[0].mxu0 %v981
  %v1148 = vpop.f32.mrb[0].mxu0
  %v1149 = vadd.f32 %v1064, %v1148
  %v1150 = vpop.f32.mrb[0].mxu0
  %1151 = vmatprep.mubr.f32.mxu0 0.0
  %1152 = vmatmul.mubr.f32.gmra.mrb[0].mxu0 %v982
  %v1153 = vpop.f32.mrb[0].mxu0
  %v1154 = vadd.f32 %v1069, %v1153
  %v1155 = vpop.f32.mrb[0].mxu0
  %1156 = vmatprep.mubr.f32.mxu0 0.0
  %1157 = vmatmul.mubr.f32.gmra.mrb[0].mxu0 %v983
  %v1158 = vpop.f32.mrb[0].mxu0
  %v1159 = vadd.f32 %v1074, %v1158
  %v1160 = vpop.f32.mrb[0].mxu0
  %1161 = vmatprep.mubr.f32.mxu0 0.0
  %1162 = vmatmul.mubr.f32.gmra.mrb[0].mxu0 %v984
  %v1163 = vpop.f32.mrb[0].mxu0
  %v1164 = vadd.f32 %v1079, %v1163
  %v1165 = vpop.f32.mrb[0].mxu0
  %1166 = vdwg.mxu0
  %1167 = vmatprep.subr.mxu0 0.0
  %1168 = vmatpush1.msra.mxu0 %v957
  %1169 = vmatprep.subr.mxu0 0.0
  %1170 = vmatpush1.msra.mxu0 %v958
  %1171 = vmatprep.subr.mxu0 0.0
  %1172 = vmatpush1.msra.mxu0 %v959
  %1173 = vmatprep.subr.mxu0 0.0
  %1174 = vmatpush1.msra.mxu0 %v960
  %1175 = vmatprep.subr.mxu0 0.0
  %1176 = vmatpush1.msra.mxu0 %v961
  %1177 = vmatprep.subr.mxu0 0.0
  %1178 = vmatpush1.msra.mxu0 %v962
  %1179 = vmatprep.subr.mxu0 0.0
  %1180 = vmatpush1.msra.mxu0 %v963
  %1181 = vmatprep.subr.mxu0 0.0
  %1182 = vmatpush1.msra.mxu0 %v964
  %1183 = vmatprep.subr.mxu0 0.0
  %1184 = vmatpush1.msra.mxu0 %v965
  %1185 = vmatprep.subr.mxu0 0.0
  %1186 = vmatpush1.msra.mxu0 %v966
  %1187 = vmatprep.subr.mxu0 0.0
  %1188 = vmatpush1.msra.mxu0 %v967
  %1189 = vmatprep.subr.mxu0 0.0
  %1190 = vmatpush1.msra.mxu0 %v968
  %1191 = vmatprep.subr.mxu0 0.0
  %1192 = vmatpush1.msra.mxu0 %v969
  %1193 = vmatprep.subr.mxu0 0.0
  %1194 = vmatpush1.msra.mxu0 %v970
  %1195 = vmatprep.subr.mxu0 0.0
  %1196 = vmatpush1.msra.mxu0 %v971
  %1197 = vmatprep.subr.mxu0 0.0
  %1198 = vmatpush1.msra.mxu0 %v972
  %1199 = vmatprep.subr.mxu0 0.0
  %1200 = vmatpush1.msra.mxu0 0.0
  %1201 = vmatprep.subr.mxu0 0.0
  %1202 = vmatpush1.msra.mxu0 0.0
  %1203 = vmatprep.subr.mxu0 0.0
  %1204 = vmatpush1.msra.mxu0 0.0
  %1205 = vmatprep.subr.mxu0 0.0
  %1206 = vmatpush1.msra.mxu0 0.0
  %1207 = vmatprep.subr.mxu0 0.0
  %1208 = vmatpush1.msra.mxu0 0.0
  %1209 = vmatprep.subr.mxu0 0.0
  %1210 = vmatpush1.msra.mxu0 0.0
  %1211 = vmatprep.subr.mxu0 0.0
  %1212 = vmatpush1.msra.mxu0 0.0
  %1213 = vmatprep.subr.mxu0 0.0
  %1214 = vmatpush1.msra.mxu0 0.0
  %1215 = vmatprep.subr.mxu0 0.0
  %1216 = vmatpush1.msra.mxu0 0.0
  %1217 = vmatprep.subr.mxu0 0.0
  %1218 = vmatpush1.msra.mxu0 0.0
  %1219 = vmatprep.subr.mxu0 0.0
  %1220 = vmatpush1.msra.mxu0 0.0
  %1221 = vmatprep.subr.mxu0 0.0
  %1222 = vmatpush1.msra.mxu0 0.0
  %1223 = vmatprep.subr.mxu0 0.0
  %1224 = vmatpush1.msra.mxu0 0.0
  %1225 = vmatprep.subr.mxu0 0.0
  %1226 = vmatpush1.msra.mxu0 0.0
  %1227 = vmatprep.subr.mxu0 0.0
  %1228 = vmatpush1.msra.mxu0 0.0
  %1229 = vmatprep.subr.mxu0 0.0
  %1230 = vmatpush1.msra.mxu0 0.0
  %1231 = vmatprep.mubr.f32.mxu0 0.0
  %1232 = vmatmul.mubr.f32.gmra.mrb[0].mxu0 %v993
  %v1233 = vpop.f32.mrb[0].mxu0
  %v1234 = vadd.f32 0.0, %v1233
  %v1235 = vpop.f32.mrb[0].mxu0
  %1236 = vmatprep.mubr.f32.mxu0 0.0
  %1237 = vmatmul.mubr.f32.gmra.mrb[0].mxu0 %v994
  %v1238 = vpop.f32.mrb[0].mxu0
  %v1239 = vadd.f32 0.0, %v1238
  %v1240 = vpop.f32.mrb[0].mxu0
  %1241 = vmatprep.mubr.f32.mxu0 0.0
  %1242 = vmatmul.mubr.f32.gmra.mrb[0].mxu0 %v995
  %v1243 = vpop.f32.mrb[0].mxu0
  %v1244 = vadd.f32 0.0, %v1243
  %v1245 = vpop.f32.mrb[0].mxu0
  %1246 = vmatprep.mubr.f32.mxu0 0.0
  %1247 = vmatmul.mubr.f32.gmra.mrb[0].mxu0 %v996
  %v1248 = vpop.f32.mrb[0].mxu0
  %v1249 = vadd.f32 0.0, %v1248
  %v1250 = vpop.f32.mrb[0].mxu0
  %1251 = vdwg.mxu0
  %v1252 = vadd.f32 %v1149, %v1234
  %v1253 = vadd.f32 %v1154, %v1239
  %v1254 = vadd.f32 %v1159, %v1244
  %v1255 = vadd.f32 %v1164, %v1249
  %v1256 = vadd.f32 %v1252, %v1253
  %v1257 = vadd.f32 %v1256, %v1254
  %v1258 = vadd.f32 %v1257, %v1255
  %v1259 = vrot.slane %v1258, 4
  %v1260 = vadd.f32 %v1258, %v1259
  %v1261 = vrot.slane %v1260, 2
  %v1262 = vadd.f32 %v1260, %v1261
  %v1263 = vrot.slane %v1262, 1
  %v1264 = vadd.f32 %v1262, %v1263
  %1265 = vmatprep.subr.mxu0 0.0
  %1266 = vmatpush1.msra.mxu0 %v280
  %1267 = vmatprep.subr.mxu0 0.0
  %1268 = vmatpush1.msra.mxu0 %v281
  %1269 = vmatprep.subr.mxu0 0.0
  %1270 = vmatpush1.msra.mxu0 %v282
  %1271 = vmatprep.subr.mxu0 0.0
  %1272 = vmatpush1.msra.mxu0 %v283
  %1273 = vmatprep.subr.mxu0 0.0
  %1274 = vmatpush1.msra.mxu0 %v284
  %1275 = vmatprep.subr.mxu0 0.0
  %1276 = vmatpush1.msra.mxu0 %v285
  %1277 = vmatprep.subr.mxu0 0.0
  %1278 = vmatpush1.msra.mxu0 %v286
  %1279 = vmatprep.subr.mxu0 0.0
  %1280 = vmatpush1.msra.mxu0 %v287
  %1281 = vmatprep.subr.mxu0 0.0
  %1282 = vmatpush1.msra.mxu0 %v288
  %1283 = vmatprep.subr.mxu0 0.0
  %1284 = vmatpush1.msra.mxu0 %v289
  %1285 = vmatprep.subr.mxu0 0.0
  %1286 = vmatpush1.msra.mxu0 %v290
  %1287 = vmatprep.subr.mxu0 0.0
  %1288 = vmatpush1.msra.mxu0 %v291
  %1289 = vmatprep.subr.mxu0 0.0
  %1290 = vmatpush1.msra.mxu0 %v292
  %1291 = vmatprep.subr.mxu0 0.0
  %1292 = vmatpush1.msra.mxu0 %v293
  %1293 = vmatprep.subr.mxu0 0.0
  %1294 = vmatpush1.msra.mxu0 %v294
  %1295 = vmatprep.subr.mxu0 0.0
  %1296 = vmatpush1.msra.mxu0 %v295
  %1297 = vmatprep.subr.mxu0 0.0
  %1298 = vmatpush1.msra.mxu0 0.0
  %1299 = vmatprep.subr.mxu0 0.0
  %1300 = vmatpush1.msra.mxu0 0.0
  %1301 = vmatprep.subr.mxu0 0.0
  %1302 = vmatpush1.msra.mxu0 0.0
  %1303 = vmatprep.subr.mxu0 0.0
  %1304 = vmatpush1.msra.mxu0 0.0
  %1305 = vmatprep.subr.mxu0 0.0
  %1306 = vmatpush1.msra.mxu0 0.0
  %1307 = vmatprep.subr.mxu0 0.0
  %1308 = vmatpush1.msra.mxu0 0.0
  %1309 = vmatprep.subr.mxu0 0.0
  %1310 = vmatpush1.msra.mxu0 0.0
  %1311 = vmatprep.subr.mxu0 0.0
  %1312 = vmatpush1.msra.mxu0 0.0
  %1313 = vmatprep.subr.mxu0 0.0
  %1314 = vmatpush1.msra.mxu0 0.0
  %1315 = vmatprep.subr.mxu0 0.0
  %1316 = vmatpush1.msra.mxu0 0.0
  %1317 = vmatprep.subr.mxu0 0.0
  %1318 = vmatpush1.msra.mxu0 0.0
  %1319 = vmatprep.subr.mxu0 0.0
  %1320 = vmatpush1.msra.mxu0 0.0
  %1321 = vmatprep.subr.mxu0 0.0
  %1322 = vmatpush1.msra.mxu0 0.0
  %1323 = vmatprep.subr.mxu0 0.0
  %1324 = vmatpush1.msra.mxu0 0.0
  %1325 = vmatprep.subr.mxu0 0.0
  %1326 = vmatpush1.msra.mxu0 0.0
  %1327 = vmatprep.subr.mxu0 0.0
  %1328 = vmatpush1.msra.mxu0 0.0
  %1329 = vmatprep.mubr.f32.mxu0 0.0
  %1330 = vmatmul.mubr.f32.gmra.mrb[0].mxu0 %v1264
  %v1331 = vpop.f32.mrb[0].mxu0
  %v1332 = vadd.f32 0.0, %v1331
  %v1333 = vpop.f32.mrb[0].mxu0
  %1334 = vdwg.mxu0
  %v1335 = vmul.f32 %v1332, 0.001953125
  %v1336 = vlaneseq
  %v1337 = vshrl.u32 %v1336, 7
  %v1338 = vsub.s32 0, %v1337
  %v1339 = vrot.slane %v1335, %v1338
  %v1340 = vsub.f32 %v1252, %v1339
  %v1341 = vsub.f32 %v1253, %v1339
  %v1342 = vsub.f32 %v1254, %v1339
  %v1343 = vsub.f32 %v1255, %v1339
  %v1344 = vmul.f32 %v1340, %v1340
  %v1345 = vmul.f32 %v1341, %v1341
  %v1346 = vmul.f32 %v1342, %v1342
  %v1347 = vmul.f32 %v1343, %v1343
  %v1348 = vadd.f32 %v1344, %v1345
  %v1349 = vadd.f32 %v1348, %v1346
  %v1350 = vadd.f32 %v1349, %v1347
  %v1351 = vrot.slane %v1350, 4
  %v1352 = vadd.f32 %v1350, %v1351
  %v1353 = vrot.slane %v1352, 2
  %v1354 = vadd.f32 %v1352, %v1353
  %v1355 = vrot.slane %v1354, 1
  %v1356 = vadd.f32 %v1354, %v1355
  %1357 = vmatprep.subr.mxu0 0.0
  %1358 = vmatpush1.msra.mxu0 %v280
  %1359 = vmatprep.subr.mxu0 0.0
  %1360 = vmatpush1.msra.mxu0 %v281
  %1361 = vmatprep.subr.mxu0 0.0
  %1362 = vmatpush1.msra.mxu0 %v282
  %1363 = vmatprep.subr.mxu0 0.0
  %1364 = vmatpush1.msra.mxu0 %v283
  %1365 = vmatprep.subr.mxu0 0.0
  %1366 = vmatpush1.msra.mxu0 %v284
  %1367 = vmatprep.subr.mxu0 0.0
  %1368 = vmatpush1.msra.mxu0 %v285
  %1369 = vmatprep.subr.mxu0 0.0
  %1370 = vmatpush1.msra.mxu0 %v286
  %1371 = vmatprep.subr.mxu0 0.0
  %1372 = vmatpush1.msra.mxu0 %v287
  %1373 = vmatprep.subr.mxu0 0.0
  %1374 = vmatpush1.msra.mxu0 %v288
  %1375 = vmatprep.subr.mxu0 0.0
  %1376 = vmatpush1.msra.mxu0 %v289
  %1377 = vmatprep.subr.mxu0 0.0
  %1378 = vmatpush1.msra.mxu0 %v290
  %1379 = vmatprep.subr.mxu0 0.0
  %1380 = vmatpush1.msra.mxu0 %v291
  %1381 = vmatprep.subr.mxu0 0.0
  %1382 = vmatpush1.msra.mxu0 %v292
  %1383 = vmatprep.subr.mxu0 0.0
  %1384 = vmatpush1.msra.mxu0 %v293
  %1385 = vmatprep.subr.mxu0 0.0
  %1386 = vmatpush1.msra.mxu0 %v294
  %1387 = vmatprep.subr.mxu0 0.0
  %1388 = vmatpush1.msra.mxu0 %v295
  %1389 = vmatprep.subr.mxu0 0.0
  %1390 = vmatpush1.msra.mxu0 0.0
  %1391 = vmatprep.subr.mxu0 0.0
  %1392 = vmatpush1.msra.mxu0 0.0
  %1393 = vmatprep.subr.mxu0 0.0
  %1394 = vmatpush1.msra.mxu0 0.0
  %1395 = vmatprep.subr.mxu0 0.0
  %1396 = vmatpush1.msra.mxu0 0.0
  %1397 = vmatprep.subr.mxu0 0.0
  %1398 = vmatpush1.msra.mxu0 0.0
  %1399 = vmatprep.subr.mxu0 0.0
  %1400 = vmatpush1.msra.mxu0 0.0
  %1401 = vmatprep.subr.mxu0 0.0
  %1402 = vmatpush1.msra.mxu0 0.0
  %1403 = vmatprep.subr.mxu0 0.0
  %1404 = vmatpush1.msra.mxu0 0.0
  %1405 = vmatprep.subr.mxu0 0.0
  %1406 = vmatpush1.msra.mxu0 0.0
  %1407 = vmatprep.subr.mxu0 0.0
  %1408 = vmatpush1.msra.mxu0 0.0
  %1409 = vmatprep.subr.mxu0 0.0
  %1410 = vmatpush1.msra.mxu0 0.0
  %1411 = vmatprep.subr.mxu0 0.0
  %1412 = vmatpush1.msra.mxu0 0.0
  %1413 = vmatprep.subr.mxu0 0.0
  %1414 = vmatpush1.msra.mxu0 0.0
  %1415 = vmatprep.subr.mxu0 0.0
  %1416 = vmatpush1.msra.mxu0 0.0
  %1417 = vmatprep.subr.mxu0 0.0
  %1418 = vmatpush1.msra.mxu0 0.0
  %1419 = vmatprep.subr.mxu0 0.0
  %1420 = vmatpush1.msra.mxu0 0.0
  %1421 = vmatprep.mubr.f32.mxu0 0.0
  %1422 = vmatmul.mubr.f32.gmra.mrb[0].mxu0 %v1356
  %v1423 = vpop.f32.mrb[0].mxu0
  %v1424 = vadd.f32 0.0, %v1423
  %v1425 = vpop.f32.mrb[0].mxu0
  %1426 = vdwg.mxu0
  %v1427 = vmul.f32 %v1424, 0.001953125
  %v1428 = vadd.f32 %v1427, 1e-05
  %v1429 = vrsqrt.pop %v1428
  %v1431 = vrot.slane %v1429, 6
  %v1433 = vmul.f32 %v24, %v1431
  %v1434 = vlaneseq
  %v1435 = vshrl.u32 %v1434, 7
  %v1436 = vsub.s32 2, %v1435
  %v1437 = vrot.slane %v1433, %v1436
  %v1438 = vmul.f32 %v1340, %v1437
  %v1439 = vmul.f32 %v1341, %v1437
  %v1440 = vmul.f32 %v1342, %v1437
  %v1441 = vmul.f32 %v1343, %v1437
  %v1442 = vlaneseq
  %v1443 = vshrl.u32 %v1442, 7
  %v1444 = vsub.s32 3, %v1443
  %v1445 = vrot.slane %v24, %v1444
  %v1446 = vadd.f32 %v1438, %v1445
  %v1447 = vadd.f32 %v1439, %v1445
  %v1448 = vadd.f32 %v1440, %v1445
  %v1449 = vadd.f32 %v1441, %v1445
  %v1450 = vadd.f32 %v1446, %v508
  %v1451 = vadd.f32 %v1447, %v514
  %v1452 = vadd.f32 %v1448, %v520
  %v1453 = vadd.f32 %v1449, %v526
  %v1454 = vmax.f32 %v1450, 0.0
  %v1455 = vmax.f32 %v1451, 0.0
  %v1456 = vmax.f32 %v1452, 0.0
  %v1457 = vmax.f32 %v1453, 0.0
  %1458 = vst [vmem:[%s5] sm:$0xff] %v1454
  %1459 = vst [vmem:[%s5 + $0x8] sm:$0xff] %v1455
  %1460 = vst [vmem:[%s5 + $0x10] sm:$0xff] %v1456
  %1461 = vst [vmem:[%s5 + $0x18] sm:$0xff] %v1457
  // Predicated region
  $region22: #{_lambda_.1} parent=0 // pred_check
    _
  $region23: #{_lambda_.1} parent=0 // pred_check_branch
    %1463 = sbr.rel (0) target = $region25
  $region24: #{_lambda_.1} parent=0 // pred_region
    _
  $region25: #{_lambda_.1} parent=0 // pred_fallthru
    _
  // Predicated region
  $region26: #{_lambda_.1} parent=0 // pred_check
    _
  $region27: #{_lambda_.1} parent=0 // pred_check_branch
    %1465 = sbr.rel (0) target = $region29
  $region28: #{_lambda_.1} parent=0 // pred_region
    _
  $region29: #{_lambda_.1} parent=0 // pred_fallthru
    _

</llo_original>
